<compile_context>
chip_gen: v7x
topology: tpu7x:2x2x1
jax: 0.10.0
libtpu: 0.0.40
codegen_flags: <defaults>
</compile_context>

<pallas_src>
import functools
import math

import jax
import jax.numpy as jnp
from jax.experimental import pallas as pl
from jax.experimental.pallas import tpu as pltpu


def _round_up(v, m):
    return ((v + m - 1) // m) * m


def _dwmlp_kernel(x_ref, w1_ref, b1_ref, wdw_ref, bdw_ref, w2_ref, b2_ref,
                  o_ref, hpad_ref, *, H, W, P):
    # x_ref   : (1, N, Cin)   tokens for one batch element (f32)
    # w1_ref  : (Cin, Chid)   fc1 weight, transposed, bf16
    # b1_ref  : (1, Chid)     f32
    # wdw_ref : (9, Chid)     depthwise taps, row = ky*3 + kx, f32
    # bdw_ref : (1, Chid)     f32
    # w2_ref  : (Chid, Cout)  fc2 weight, transposed, bf16
    # b2_ref  : (1, Cout)     f32
    # o_ref   : (1, N, Cout)
    # hpad_ref: (N + 2*P, Chid) f32 scratch; P >= W+1, multiple of 8
    N = H * W
    Chid = w1_ref.shape[1]

    # ---- fc1 (bf16 MXU operands, f32 accumulation) -------------------------
    x = x_ref[0].astype(jnp.bfloat16)                        # (N, Cin)
    h = jnp.dot(x, w1_ref[...],
                preferred_element_type=jnp.float32) + b1_ref[...]  # (N, Chid)

    # ---- stage zero-padded slab (zero only the pad bands) ------------------
    pad_zeros = jnp.zeros((P, Chid), jnp.float32)
    hpad_ref[pl.ds(0, P), :] = pad_zeros
    hpad_ref[pl.ds(P + N, P), :] = pad_zeros
    hpad_ref[pl.ds(P, N), :] = h                              # interior (b1 folded in)

    # Column predicates (computed once, (N,1), broadcast over lanes):
    # left/right image borders are the only flat-index wraparounds; the
    # top/bottom borders are covered by the zero pad bands.
    col = jax.lax.broadcasted_iota(jnp.int32, (N, 1), 0) % W
    mask_l = col > 0                                          # valid for dx = -1
    mask_r = col < (W - 1)                                    # valid for dx = +1

    wdw = wdw_ref[...]                                        # (9, Chid)

    def tap(dy, dx):
        # Shifted read of the padded slab; static offset, always in-bounds.
        return hpad_ref[pl.ds(P + dy * W + dx, N), :]

    # ---- depthwise 3x3 conv, taps grouped by dx -----------------------------
    # dx = 0 group: center from registers, vertical taps mask-free.
    mid = (h * wdw[4:5, :]
           + tap(-1, 0) * wdw[1:2, :]
           + tap(+1, 0) * wdw[7:8, :])
    # dx = -1 group: one shared column mask.
    left = (tap(-1, -1) * wdw[0:1, :]
            + tap(0, -1) * wdw[3:4, :]
            + tap(+1, -1) * wdw[6:7, :])
    # dx = +1 group: one shared column mask.
    right = (tap(-1, +1) * wdw[2:3, :]
             + tap(0, +1) * wdw[5:6, :]
             + tap(+1, +1) * wdw[8:9, :])

    acc = (bdw_ref[...] + mid
           + jnp.where(mask_l, left, 0.0)
           + jnp.where(mask_r, right, 0.0))                   # (N, Chid) f32

    # ---- GELU (tanh approximation; EUP tanh) --------------------------------
    c = jnp.float32(0.7978845608028654)                       # sqrt(2/pi)
    g = 0.5 * acc * (1.0 + jnp.tanh(c * (acc + 0.044715 * acc * acc * acc)))

    # ---- fc2 (bf16 MXU operands, f32 accumulation) --------------------------
    out = jnp.dot(g.astype(jnp.bfloat16), w2_ref[...],
                  preferred_element_type=jnp.float32) + b2_ref[...]
    o_ref[0] = out.astype(o_ref.dtype)


def dwmlp_forward(x, H, W, w1, b1, w_dw, b_dw, w2, b2):
    """DWMlp.forward.

    x    : (B, N, Cin) with N == H*W
    w1   : (Chid, Cin)     b1  : (Chid,)      torch nn.Linear layout
    w_dw : (Chid, 1, 3, 3) b_dw: (Chid,)      torch depthwise Conv2d layout
    w2   : (Cout, Chid)    b2  : (Cout,)
    returns (B, N, Cout)
    """
    B, N, Cin = x.shape
    assert N == H * W, "token count must equal H*W"
    Chid = w1.shape[0]
    Cout = w2.shape[0]

    # Lane-dense channel padding (weights/biases only; exact zeros so padded
    # channels contribute nothing and padded outputs are zero).
    Chid_p = _round_up(Chid, 128)
    Cout_p = _round_up(Cout, 128)
    ph, po = Chid_p - Chid, Cout_p - Cout

    w1t = jnp.pad(w1.T, ((0, 0), (0, ph))).astype(jnp.bfloat16)       # (Cin, Chid_p)
    b1p = jnp.pad(b1, (0, ph)).reshape(1, Chid_p).astype(jnp.float32)
    wdw9 = jnp.pad(w_dw.reshape(Chid, 9).T, ((0, 0), (0, ph))
                   ).astype(jnp.float32)                               # (9, Chid_p)
    bdwp = jnp.pad(b_dw, (0, ph)).reshape(1, Chid_p).astype(jnp.float32)
    w2t = jnp.pad(w2.T, ((0, ph), (0, po))).astype(jnp.bfloat16)       # (Chid_p, Cout_p)
    b2p = jnp.pad(b2, (0, po)).reshape(1, Cout_p).astype(jnp.float32)

    # Pad band height: >= W+1 (covers all 3x3 shifts), rounded to 8 so the
    # interior slab write starts on a sublane boundary.
    P = _round_up(W + 1, 8)

    # VMEM budget: slab + double-buffered in/out blocks + weights + headroom.
    itemsize = jnp.dtype(x.dtype).itemsize
    slab_bytes = (N + 2 * P) * Chid_p * 4
    block_bytes = 2 * (N * Cin * itemsize + N * Cout_p * itemsize)
    weight_bytes = 2 * ((Cin * Chid_p + Chid_p * Cout_p) * 2
                        + (11 * Chid_p + Cout_p) * 4)
    need = slab_bytes + block_bytes + weight_bytes + (8 << 20)
    vmem_limit = int(min(100 << 20, max(32 << 20, need)))

    kernel = functools.partial(_dwmlp_kernel, H=H, W=W, P=P)

    out = pl.pallas_call(
        kernel,
        out_shape=jax.ShapeDtypeStruct((B, N, Cout_p), x.dtype),
        grid_spec=pltpu.PrefetchScalarGridSpec(
            num_scalar_prefetch=0,
            grid=(B,),
            in_specs=[
                pl.BlockSpec((1, N, Cin), lambda b: (b, 0, 0)),
                pl.BlockSpec((Cin, Chid_p), lambda b: (0, 0)),
                pl.BlockSpec((1, Chid_p), lambda b: (0, 0)),
                pl.BlockSpec((9, Chid_p), lambda b: (0, 0)),
                pl.BlockSpec((1, Chid_p), lambda b: (0, 0)),
                pl.BlockSpec((Chid_p, Cout_p), lambda b: (0, 0)),
                pl.BlockSpec((1, Cout_p), lambda b: (0, 0)),
            ],
            out_specs=pl.BlockSpec((1, N, Cout_p), lambda b: (b, 0, 0)),
            scratch_shapes=[pltpu.VMEM((N + 2 * P, Chid_p), jnp.float32)],
        ),
        compiler_params=pltpu.CompilerParams(
            dimension_semantics=("parallel",),
            vmem_limit_bytes=vmem_limit,
        ),
    )(x, w1t, b1p, wdw9, bdwp, w2t, b2p)

    return out[..., :Cout] if Cout_p != Cout else out


def dwmlp_reference(x, H, W, w1, b1, w_dw, b_dw, w2, b2):
    """Pure-JAX f32 reference (XLA grouped conv)."""
    B, N, Cin = x.shape
    Chid = w1.shape[0]
    h = x @ w1.T + b1                                         # (B, N, Chid)
    himg = h.transpose(0, 2, 1).reshape(B, Chid, H, W)        # NCHW
    conv = jax.lax.conv_general_dilated(
        himg, w_dw, window_strides=(1, 1), padding=((1, 1), (1, 1)),
        dimension_numbers=("NCHW", "OIHW", "NCHW"),
        feature_group_count=Chid)
    conv = conv + b_dw.reshape(1, Chid, 1, 1)
    t = conv.reshape(B, Chid, H * W).transpose(0, 2, 1)       # (B, N, Chid)
    g = jax.nn.gelu(t, approximate=True)                      # tanh GELU
    return g @ w2.T + b2


if __name__ == "__main__":
    key = jax.random.PRNGKey(0)
    B, H, W = 2, 16, 16
    N = H * W
    in_features = 32
    hidden_features = 64
    out_features = in_features

    ks = jax.random.split(key, 7)
    x = jax.random.normal(ks[0], (B, N, in_features), dtype=jnp.float32)
    w1 = 0.02 * jax.random.normal(ks[1], (hidden_features, in_features),
                                  dtype=jnp.float32)
    b1 = 0.01 * jax.random.normal(ks[2], (hidden_features,), dtype=jnp.float32)
    w_dw = math.sqrt(2.0 / 9.0) * jax.random.normal(
        ks[3], (hidden_features, 1, 3, 3), dtype=jnp.float32)
    b_dw = 0.01 * jax.random.normal(ks[4], (hidden_features,),
                                    dtype=jnp.float32)
    w2 = 0.02 * jax.random.normal(ks[5], (out_features, hidden_features),
                                  dtype=jnp.float32)
    b2 = 0.01 * jax.random.normal(ks[6], (out_features,), dtype=jnp.float32)

    out = dwmlp_forward(x, H, W, w1, b1, w_dw, b_dw, w2, b2)
    out = jax.block_until_ready(out)

    ref = dwmlp_reference(x, H, W, w1, b1, w_dw, b_dw, w2, b2)
    ref = jax.block_until_ready(ref)

    assert out.shape == (B, N, out_features)
    # Tolerance accounts for bf16 MXU operands (f32 accumulation) vs f32 ref.
    assert jnp.allclose(out, ref, atol=3e-3, rtol=1e-2), (
        float(jnp.max(jnp.abs(out - ref))))

    print("KERNEL_OK")
</pallas_src>

<mosaic_0001>
module attributes {stable_mosaic.version = 11 : i64} {
  func.func @_dwmlp_kernel(%arg0: i32, %arg1: memref<1x256x32xf32, #tpu.memory_space<vmem>>, %arg2: memref<32x128xbf16, #tpu.memory_space<vmem>>, %arg3: memref<1x128xf32, #tpu.memory_space<vmem>>, %arg4: memref<9x128xf32, #tpu.memory_space<vmem>>, %arg5: memref<1x128xf32, #tpu.memory_space<vmem>>, %arg6: memref<128x128xbf16, #tpu.memory_space<vmem>>, %arg7: memref<1x128xf32, #tpu.memory_space<vmem>>, %arg8: memref<1x256x128xf32, #tpu.memory_space<vmem>>, %arg9: memref<304x128xf32, #tpu.memory_space<vmem>>) attributes {dimension_semantics = [#tpu.dimension_semantics<parallel>], iteration_bounds = array<i64: 2>, scalar_prefetch = 0 : i64, scratch_operands = 1 : i64, tpu.core_type = #tpu.core_type<tc>, window_params = [{transform_indices = @transform_0, window_bounds = array<i64: 1, 256, 32>}, {pipeline_mode = #tpu.pipeline_mode<synchronous>, transform_indices = @transform_1, window_bounds = array<i64: 32, 128>}, {pipeline_mode = #tpu.pipeline_mode<synchronous>, transform_indices = @transform_2, window_bounds = array<i64: 1, 128>}, {pipeline_mode = #tpu.pipeline_mode<synchronous>, transform_indices = @transform_3, window_bounds = array<i64: 9, 128>}, {pipeline_mode = #tpu.pipeline_mode<synchronous>, transform_indices = @transform_4, window_bounds = array<i64: 1, 128>}, {pipeline_mode = #tpu.pipeline_mode<synchronous>, transform_indices = @transform_5, window_bounds = array<i64: 128, 128>}, {pipeline_mode = #tpu.pipeline_mode<synchronous>, transform_indices = @transform_6, window_bounds = array<i64: 1, 128>}, {transform_indices = @transform_7, window_bounds = array<i64: 1, 256, 128>}]} {
    %c0 = arith.constant 0 : index
    %c0_0 = arith.constant 0 : index
    %c0_1 = arith.constant 0 : index
    %0 = vector.load %arg1[%c0, %c0_0, %c0_1] : memref<1x256x32xf32, #tpu.memory_space<vmem>>, vector<1x256x32xf32>
    %1 = vector.shape_cast %0 : vector<1x256x32xf32> to vector<256x32xf32>
    %2 = arith.truncf %1 : vector<256x32xf32> to vector<256x32xbf16>
    %c0_2 = arith.constant 0 : index
    %c0_3 = arith.constant 0 : index
    %3 = vector.load %arg2[%c0_2, %c0_3] : memref<32x128xbf16, #tpu.memory_space<vmem>>, vector<32x128xbf16>
    %cst = arith.constant dense<0.000000e+00> : vector<256x128xf32>
    %4 = tpu.matmul %2, %3, %cst {dimension_numbers = #tpu.dot_dimension_numbers<[1], [0], [0], [1], [0, 0, 1, 1], [], []>} : vector<256x32xbf16>, vector<32x128xbf16>, vector<256x128xf32> -> vector<256x128xf32>
    %c0_4 = arith.constant 0 : index
    %c0_5 = arith.constant 0 : index
    %5 = vector.load %arg3[%c0_4, %c0_5] : memref<1x128xf32, #tpu.memory_space<vmem>>, vector<1x128xf32>
    %6 = vector.broadcast %5 : vector<1x128xf32> to vector<256x128xf32>
    %7 = arith.addf %4, %6 : vector<256x128xf32>
    %cst_6 = arith.constant 0.000000e+00 : f32
    %8 = vector.broadcast %cst_6 : f32 to vector<24x128xf32>
    %c0_7 = arith.constant 0 : index
    %c0_8 = arith.constant 0 : index
    %9 = vector.load %arg9[%c0_7, %c0_8] : memref<304x128xf32, #tpu.memory_space<vmem>>, vector<24x128xf32>
    tpu.vector_store %arg9[%c0_7, %c0_8], %8 {strides = array<i32>} : memref<304x128xf32, #tpu.memory_space<vmem>>, vector<24x128xf32>,
    %c280 = arith.constant 280 : index
    %c0_9 = arith.constant 0 : index
    %10 = vector.load %arg9[%c280, %c0_9] : memref<304x128xf32, #tpu.memory_space<vmem>>, vector<24x128xf32>
    tpu.vector_store %arg9[%c280, %c0_9], %8 {strides = array<i32>} : memref<304x128xf32, #tpu.memory_space<vmem>>, vector<24x128xf32>,
    %c24 = arith.constant 24 : index
    %c0_10 = arith.constant 0 : index
    %11 = vector.load %arg9[%c24, %c0_10] : memref<304x128xf32, #tpu.memory_space<vmem>>, vector<256x128xf32>
    tpu.vector_store %arg9[%c24, %c0_10], %7 {strides = array<i32>} : memref<304x128xf32, #tpu.memory_space<vmem>>, vector<256x128xf32>,
    %12 = tpu.iota {dimensions = array<i32: 0>} : vector<256x1xi32>
    %c16_i32 = arith.constant 16 : i32
    %c0_i32 = arith.constant 0 : i32
    %13 = arith.cmpi eq, %c16_i32, %c0_i32 : i32
    %c1_i32 = arith.constant 1 : i32
    %14 = arith.select %13, %c1_i32, %c16_i32 : i32
    %15 = vector.broadcast %14 : i32 to vector<256x1xi32>
    %16 = arith.remsi %12, %15 : vector<256x1xi32>
    %c0_i32_11 = arith.constant 0 : i32
    %17 = vector.broadcast %c0_i32_11 : i32 to vector<256x1xi32>
    %18 = arith.cmpi ne, %16, %17 : vector<256x1xi32>
    %c0_i32_12 = arith.constant 0 : i32
    %19 = vector.broadcast %c0_i32_12 : i32 to vector<256x1xi32>
    %20 = arith.cmpi slt, %16, %19 : vector<256x1xi32>
    %c0_i32_13 = arith.constant 0 : i32
    %21 = arith.cmpi slt, %14, %c0_i32_13 : i32
    %22 = vector.broadcast %21 : i1 to vector<256x1xi1>
    %23 = vector.broadcast %22 : vector<256x1xi1> to vector<256x1xi1>
    %24 = arith.xori %20, %23 : vector<256x1xi1>
    %25 = arith.andi %24, %18 : vector<256x1xi1>
    %26 = vector.broadcast %14 : i32 to vector<256x1xi32>
    %27 = arith.addi %16, %26 : vector<256x1xi32>
    %28 = arith.select %25, %27, %16 : vector<256x1xi1>, vector<256x1xi32>
    %c0_i32_14 = arith.constant 0 : i32
    %29 = vector.broadcast %c0_i32_14 : i32 to vector<256x1xi32>
    %30 = arith.cmpi sgt, %28, %29 : vector<256x1xi32>
    %c15_i32 = arith.constant 15 : i32
    %31 = vector.broadcast %c15_i32 : i32 to vector<256x1xi32>
    %32 = arith.cmpi slt, %28, %31 : vector<256x1xi32>
    %c0_15 = arith.constant 0 : index
    %c0_16 = arith.constant 0 : index
    %33 = vector.load %arg4[%c0_15, %c0_16] : memref<9x128xf32, #tpu.memory_space<vmem>>, vector<9x128xf32>
    %34 = vector.extract_strided_slice %33 {offsets = [4, 0], sizes = [1, 128], strides = [1, 1]} : vector<9x128xf32> to vector<1x128xf32>
    %35 = vector.broadcast %34 : vector<1x128xf32> to vector<256x128xf32>
    %36 = arith.mulf %7, %35 : vector<256x128xf32>
    %c8 = arith.constant 8 : index
    %c0_17 = arith.constant 0 : index
    %37 = vector.load %arg9[%c8, %c0_17] : memref<304x128xf32, #tpu.memory_space<vmem>>, vector<256x128xf32>
    %38 = vector.extract_strided_slice %33 {offsets = [1, 0], sizes = [1, 128], strides = [1, 1]} : vector<9x128xf32> to vector<1x128xf32>
    %39 = vector.broadcast %38 : vector<1x128xf32> to vector<256x128xf32>
    %40 = arith.mulf %37, %39 : vector<256x128xf32>
    %41 = arith.addf %36, %40 : vector<256x128xf32>
    %c40 = arith.constant 40 : index
    %c0_18 = arith.constant 0 : index
    %42 = vector.load %arg9[%c40, %c0_18] : memref<304x128xf32, #tpu.memory_space<vmem>>, vector<256x128xf32>
    %43 = vector.extract_strided_slice %33 {offsets = [7, 0], sizes = [1, 128], strides = [1, 1]} : vector<9x128xf32> to vector<1x128xf32>
    %44 = vector.broadcast %43 : vector<1x128xf32> to vector<256x128xf32>
    %45 = arith.mulf %42, %44 : vector<256x128xf32>
    %46 = arith.addf %41, %45 : vector<256x128xf32>
    %c7 = arith.constant 7 : index
    %c0_19 = arith.constant 0 : index
    %47 = vector.load %arg9[%c7, %c0_19] : memref<304x128xf32, #tpu.memory_space<vmem>>, vector<256x128xf32>
    %48 = vector.extract_strided_slice %33 {offsets = [0, 0], sizes = [1, 128], strides = [1, 1]} : vector<9x128xf32> to vector<1x128xf32>
    %49 = vector.broadcast %48 : vector<1x128xf32> to vector<256x128xf32>
    %50 = arith.mulf %47, %49 : vector<256x128xf32>
    %c23 = arith.constant 23 : index
    %c0_20 = arith.constant 0 : index
    %51 = vector.load %arg9[%c23, %c0_20] : memref<304x128xf32, #tpu.memory_space<vmem>>, vector<256x128xf32>
    %52 = vector.extract_strided_slice %33 {offsets = [3, 0], sizes = [1, 128], strides = [1, 1]} : vector<9x128xf32> to vector<1x128xf32>
    %53 = vector.broadcast %52 : vector<1x128xf32> to vector<256x128xf32>
    %54 = arith.mulf %51, %53 : vector<256x128xf32>
    %55 = arith.addf %50, %54 : vector<256x128xf32>
    %c39 = arith.constant 39 : index
    %c0_21 = arith.constant 0 : index
    %56 = vector.load %arg9[%c39, %c0_21] : memref<304x128xf32, #tpu.memory_space<vmem>>, vector<256x128xf32>
    %57 = vector.extract_strided_slice %33 {offsets = [6, 0], sizes = [1, 128], strides = [1, 1]} : vector<9x128xf32> to vector<1x128xf32>
    %58 = vector.broadcast %57 : vector<1x128xf32> to vector<256x128xf32>
    %59 = arith.mulf %56, %58 : vector<256x128xf32>
    %60 = arith.addf %55, %59 : vector<256x128xf32>
    %c9 = arith.constant 9 : index
    %c0_22 = arith.constant 0 : index
    %61 = vector.load %arg9[%c9, %c0_22] : memref<304x128xf32, #tpu.memory_space<vmem>>, vector<256x128xf32>
    %62 = vector.extract_strided_slice %33 {offsets = [2, 0], sizes = [1, 128], strides = [1, 1]} : vector<9x128xf32> to vector<1x128xf32>
    %63 = vector.broadcast %62 : vector<1x128xf32> to vector<256x128xf32>
    %64 = arith.mulf %61, %63 : vector<256x128xf32>
    %c25 = arith.constant 25 : index
    %c0_23 = arith.constant 0 : index
    %65 = vector.load %arg9[%c25, %c0_23] : memref<304x128xf32, #tpu.memory_space<vmem>>, vector<256x128xf32>
    %66 = vector.extract_strided_slice %33 {offsets = [5, 0], sizes = [1, 128], strides = [1, 1]} : vector<9x128xf32> to vector<1x128xf32>
    %67 = vector.broadcast %66 : vector<1x128xf32> to vector<256x128xf32>
    %68 = arith.mulf %65, %67 : vector<256x128xf32>
    %69 = arith.addf %64, %68 : vector<256x128xf32>
    %c41 = arith.constant 41 : index
    %c0_24 = arith.constant 0 : index
    %70 = vector.load %arg9[%c41, %c0_24] : memref<304x128xf32, #tpu.memory_space<vmem>>, vector<256x128xf32>
    %71 = vector.extract_strided_slice %33 {offsets = [8, 0], sizes = [1, 128], strides = [1, 1]} : vector<9x128xf32> to vector<1x128xf32>
    %72 = vector.broadcast %71 : vector<1x128xf32> to vector<256x128xf32>
    %73 = arith.mulf %70, %72 : vector<256x128xf32>
    %74 = arith.addf %69, %73 : vector<256x128xf32>
    %c0_25 = arith.constant 0 : index
    %c0_26 = arith.constant 0 : index
    %75 = vector.load %arg5[%c0_25, %c0_26] : memref<1x128xf32, #tpu.memory_space<vmem>>, vector<1x128xf32>
    %76 = vector.broadcast %75 : vector<1x128xf32> to vector<256x128xf32>
    %77 = arith.addf %76, %46 : vector<256x128xf32>
    %cst_27 = arith.constant 0.000000e+00 : f32
    %78 = vector.shape_cast %30 : vector<256x1xi1> to vector<256x1xi1>
    %79 = vector.broadcast %78 : vector<256x1xi1> to vector<256x128xi1>
    %80 = vector.broadcast %cst_27 : f32 to vector<256x128xf32>
    %81 = arith.select %79, %60, %80 : vector<256x128xi1>, vector<256x128xf32>
    %82 = arith.addf %77, %81 : vector<256x128xf32>
    %cst_28 = arith.constant 0.000000e+00 : f32
    %83 = vector.shape_cast %32 : vector<256x1xi1> to vector<256x1xi1>
    %84 = vector.broadcast %83 : vector<256x1xi1> to vector<256x128xi1>
    %85 = vector.broadcast %cst_28 : f32 to vector<256x128xf32>
    %86 = arith.select %84, %74, %85 : vector<256x128xi1>, vector<256x128xf32>
    %87 = arith.addf %82, %86 : vector<256x128xf32>
    %cst_29 = arith.constant 5.000000e-01 : f32
    %88 = vector.broadcast %cst_29 : f32 to vector<256x128xf32>
    %89 = arith.mulf %88, %87 : vector<256x128xf32>
    %cst_30 = arith.constant 4.471500e-02 : f32
    %90 = vector.broadcast %cst_30 : f32 to vector<256x128xf32>
    %91 = arith.mulf %90, %87 : vector<256x128xf32>
    %92 = arith.mulf %91, %87 : vector<256x128xf32>
    %93 = arith.mulf %92, %87 : vector<256x128xf32>
    %94 = arith.addf %87, %93 : vector<256x128xf32>
    %cst_31 = arith.constant 0.797884583 : f32
    %95 = vector.broadcast %cst_31 : f32 to vector<256x128xf32>
    %96 = arith.mulf %95, %94 : vector<256x128xf32>
    %97 = math.tanh %96 : vector<256x128xf32>
    %cst_32 = arith.constant 1.000000e+00 : f32
    %98 = vector.broadcast %cst_32 : f32 to vector<256x128xf32>
    %99 = arith.addf %98, %97 : vector<256x128xf32>
    %100 = arith.mulf %89, %99 : vector<256x128xf32>
    %101 = arith.truncf %100 : vector<256x128xf32> to vector<256x128xbf16>
    %c0_33 = arith.constant 0 : index
    %c0_34 = arith.constant 0 : index
    %102 = vector.load %arg6[%c0_33, %c0_34] : memref<128x128xbf16, #tpu.memory_space<vmem>>, vector<128x128xbf16>
    %cst_35 = arith.constant dense<0.000000e+00> : vector<256x128xf32>
    %103 = tpu.matmul %101, %102, %cst_35 {dimension_numbers = #tpu.dot_dimension_numbers<[1], [0], [0], [1], [0, 0, 1, 1], [], []>} : vector<256x128xbf16>, vector<128x128xbf16>, vector<256x128xf32> -> vector<256x128xf32>
    %c0_36 = arith.constant 0 : index
    %c0_37 = arith.constant 0 : index
    %104 = vector.load %arg7[%c0_36, %c0_37] : memref<1x128xf32, #tpu.memory_space<vmem>>, vector<1x128xf32>
    %105 = vector.broadcast %104 : vector<1x128xf32> to vector<256x128xf32>
    %106 = arith.addf %103, %105 : vector<256x128xf32>
    %c0_38 = arith.constant 0 : index
    %c0_39 = arith.constant 0 : index
    %c0_40 = arith.constant 0 : index
    %107 = vector.load %arg8[%c0_38, %c0_39, %c0_40] : memref<1x256x128xf32, #tpu.memory_space<vmem>>, vector<1x256x128xf32>
    %108 = vector.shape_cast %107 : vector<1x256x128xf32> to vector<256x128xf32>
    %109 = vector.shape_cast %106 : vector<256x128xf32> to vector<1x256x128xf32>
    tpu.vector_store %arg8[%c0_38, %c0_39, %c0_40], %109 {strides = array<i32>} : memref<1x256x128xf32, #tpu.memory_space<vmem>>, vector<1x256x128xf32>,
    return
  }
  func.func @transform_0(%arg0: i32) -> (i32, i32, i32) {
    %c0_i32 = arith.constant 0 : i32
    %c0_i32_0 = arith.constant 0 : i32
    %c0_i32_1 = arith.constant 0 : i32
    return %arg0, %c0_i32, %c0_i32_0 : i32, i32, i32
  }
  func.func @transform_1(%arg0: i32) -> (i32, i32) {
    %c0_i32 = arith.constant 0 : i32
    %c0_i32_0 = arith.constant 0 : i32
    %c0_i32_1 = arith.constant 0 : i32
    return %c0_i32, %c0_i32_0 : i32, i32
  }
  func.func @transform_2(%arg0: i32) -> (i32, i32) {
    %c0_i32 = arith.constant 0 : i32
    %c0_i32_0 = arith.constant 0 : i32
    %c0_i32_1 = arith.constant 0 : i32
    return %c0_i32, %c0_i32_0 : i32, i32
  }
  func.func @transform_3(%arg0: i32) -> (i32, i32) {
    %c0_i32 = arith.constant 0 : i32
    %c0_i32_0 = arith.constant 0 : i32
    %c0_i32_1 = arith.constant 0 : i32
    return %c0_i32, %c0_i32_0 : i32, i32
  }
  func.func @transform_4(%arg0: i32) -> (i32, i32) {
    %c0_i32 = arith.constant 0 : i32
    %c0_i32_0 = arith.constant 0 : i32
    %c0_i32_1 = arith.constant 0 : i32
    return %c0_i32, %c0_i32_0 : i32, i32
  }
  func.func @transform_5(%arg0: i32) -> (i32, i32) {
    %c0_i32 = arith.constant 0 : i32
    %c0_i32_0 = arith.constant 0 : i32
    %c0_i32_1 = arith.constant 0 : i32
    return %c0_i32, %c0_i32_0 : i32, i32
  }
  func.func @transform_6(%arg0: i32) -> (i32, i32) {
    %c0_i32 = arith.constant 0 : i32
    %c0_i32_0 = arith.constant 0 : i32
    %c0_i32_1 = arith.constant 0 : i32
    return %c0_i32, %c0_i32_0 : i32, i32
  }
  func.func @transform_7(%arg0: i32) -> (i32, i32, i32) {
    %c0_i32 = arith.constant 0 : i32
    %c0_i32_0 = arith.constant 0 : i32
    %c0_i32_1 = arith.constant 0 : i32
    return %arg0, %c0_i32, %c0_i32_0 : i32, i32, i32
  }
}

</mosaic_0001>

<llo_original>
// kernel: tpu_custom_call.1
$region0: #{tpu_custom_call.1}
  #allocation0 [shape = 'u32[]', space=smem, size = 0x4, offset = 0x4, fixed_abs, tag = 'smem constant byte address 0x4 - core index']
  #allocation1 [shape = 'u32[144,128]{1,0:T(1,128)}', space=vmem, size = 0x12000, scoped, tag = 'internal scratch']
  #allocation2 [shape = 'f32[304,128]{1,0:T(8,128)}', space=vmem, size = 0x26000, scoped, tag = 'scratch operand']
  %s0 = inlined_call_operand.vmem [shape: f32[2,256,32], index: 0, kind: input, shape index: {}]
  %s1 = inlined_call_operand.vmem [shape: bf16[32,128], index: 1, kind: input, shape index: {}]
  %s2 = inlined_call_operand.vmem [shape: f32[1,128], index: 2, kind: input, shape index: {}]
  %s3 = inlined_call_operand.vmem [shape: f32[9,128], index: 3, kind: input, shape index: {}]
  %s4 = inlined_call_operand.vmem [shape: f32[1,128], index: 4, kind: input, shape index: {}]
  %s5 = inlined_call_operand.vmem [shape: bf16[128,128], index: 5, kind: input, shape index: {}]
  %s6 = inlined_call_operand.vmem [shape: f32[1,128], index: 6, kind: input, shape index: {}]
  %s7 = inlined_call_operand.hbm [shape: f32[2,256,128], index: 7, kind: output, shape index: {}]
  %s8 = sld [smem:[#allocation0]]
  $region61: #{tpu_custom_call.1} parent=0
    _
  %s10 = ssub.s32 1, %s8
  %s11 = scalar_select 0, %s10, %s8
  $region1: #{tpu_custom_call.1} parent=0
    #allocation3 [shape = 'u8[262144]{0}', space=vmem, size = 0x40000, scoped, tag = 'output window, operand 0']
    #allocation4 [shape = 's32[2]{0}', space=sflag, size = 0x8, scoped, tag = 'scoped memory for tpu_custom_call.1']
    %12 = vsyncpa [#allocation4], 0
    %s13 = scalar_lea.sflag [#allocation4], 1
    %14 = vsyncpa %s13, 0
    loop: start=0, step=1, limit=4
    $region2: #{tpu_custom_call.1} parent=1 // loop_pre_header
      _
    $region3: #{tpu_custom_call.1} parent=1 // loop_header
      %s16 = sphi 0, %s20
      %p17 = scmp.ge.s32.totalorder %s16, 4
      %s26 = sphi 0, %s28
      %s29 = sphi 0, %s26
      %s30 = sphi 0, %s29
      %s46 = sphi 0, %s30
      %s50 = sphi 0, %s50
      %s52 = sphi 0, %s50
      %s53 = sphi 0, %s52
      %s67 = sphi 0, %s53
      %s71 = sphi 0, %s71
      %s73 = sphi 0, %s71
      %s74 = sphi 0, %s73
      %s88 = sphi 0, %s74
      %s92 = sphi 0, %s92
      %s94 = sphi 0, %s92
      %s95 = sphi 0, %s94
      %s109 = sphi 0, %s95
      %s113 = sphi 0, %s113
      %s115 = sphi 0, %s113
      %s116 = sphi 0, %s115
      %s130 = sphi 0, %s116
      %s134 = sphi 0, %s134
      %s136 = sphi 0, %s134
      %s137 = sphi 0, %s136
      %s151 = sphi 0, %s137
      %s155 = sphi 0, %s155
      %s157 = sphi 0, %s155
      %s158 = sphi 0, %s157
      %s172 = sphi 0, %s158
      %s178 = sphi 0, %s180
      %s181 = sphi 0, %s178
      %s182 = sphi 0, %s181
      %s198 = sphi 0, %s182
    $region4: #{tpu_custom_call.1} parent=1 // loop_header_branch
      %19 = sbr.rel (%p17) target = $region8
    $region5: #{tpu_custom_call.1} parent=1 // loop_body
      %s21 = ssub.s32 %s16, 1
      %s22 = ssub.s32 %s16, 2
      %s23 = sadd.s32 %s16, 1
      %s24 = ssub.s32 %s16, %s23
      %p25 = scmp.eq.s32.totalorder %s24, 0
      %s27 = sadd.s32 %s26, 1
      %s28 = scalar_select %p25, %s26, %s27
      %p31 = pneg %p25
      %p32 = scmp.eq.s32.totalorder %s16, 1
      %p33 = por %p31, %p32
      %p34 = scmp.ne.s32.totalorder %s26, %s29
      %p35 = scmp.eq.s32.totalorder %s16, 0
      %p36 = por %p34, %p35
      %p37 = scmp.ne.s32.totalorder %s26, %s29
      %p38 = scmp.eq.s32.totalorder %s21, 1
      %p39 = por %p37, %p38
      %p40 = scmp.ne.s32.totalorder %s29, %s30
      %p41 = scmp.eq.s32.totalorder %s21, 0
      %p42 = por %p40, %p41
      %p43 = scmp.ne.s32.totalorder %s29, %s30
      %p44 = scmp.eq.s32.totalorder %s22, 1
      %p45 = por %p43, %p44
      %p47 = scmp.ne.s32.totalorder %s30, %s46
      %p48 = scmp.eq.s32.totalorder %s22, 0
      %p49 = por %p47, %p48
      %s51 = sadd.s32 %s50, 1
      %p54 = scmp.eq.s32.totalorder %s16, 1
      %p55 = scmp.ne.s32.totalorder %s50, %s52
      %p56 = scmp.eq.s32.totalorder %s16, 0
      %p57 = por %p55, %p56
      %p58 = scmp.ne.s32.totalorder %s50, %s52
      %p59 = scmp.eq.s32.totalorder %s21, 1
      %p60 = por %p58, %p59
      %p61 = scmp.ne.s32.totalorder %s52, %s53
      %p62 = scmp.eq.s32.totalorder %s21, 0
      %p63 = por %p61, %p62
      %p64 = scmp.ne.s32.totalorder %s52, %s53
      %p65 = scmp.eq.s32.totalorder %s22, 1
      %p66 = por %p64, %p65
      %p68 = scmp.ne.s32.totalorder %s53, %s67
      %p69 = scmp.eq.s32.totalorder %s22, 0
      %p70 = por %p68, %p69
      %s72 = sadd.s32 %s71, 1
      %p75 = scmp.eq.s32.totalorder %s16, 1
      %p76 = scmp.ne.s32.totalorder %s71, %s73
      %p77 = scmp.eq.s32.totalorder %s16, 0
      %p78 = por %p76, %p77
      %p79 = scmp.ne.s32.totalorder %s71, %s73
      %p80 = scmp.eq.s32.totalorder %s21, 1
      %p81 = por %p79, %p80
      %p82 = scmp.ne.s32.totalorder %s73, %s74
      %p83 = scmp.eq.s32.totalorder %s21, 0
      %p84 = por %p82, %p83
      %p85 = scmp.ne.s32.totalorder %s73, %s74
      %p86 = scmp.eq.s32.totalorder %s22, 1
      %p87 = por %p85, %p86
      %p89 = scmp.ne.s32.totalorder %s74, %s88
      %p90 = scmp.eq.s32.totalorder %s22, 0
      %p91 = por %p89, %p90
      %s93 = sadd.s32 %s92, 1
      %p96 = scmp.eq.s32.totalorder %s16, 1
      %p97 = scmp.ne.s32.totalorder %s92, %s94
      %p98 = scmp.eq.s32.totalorder %s16, 0
      %p99 = por %p97, %p98
      %p100 = scmp.ne.s32.totalorder %s92, %s94
      %p101 = scmp.eq.s32.totalorder %s21, 1
      %p102 = por %p100, %p101
      %p103 = scmp.ne.s32.totalorder %s94, %s95
      %p104 = scmp.eq.s32.totalorder %s21, 0
      %p105 = por %p103, %p104
      %p106 = scmp.ne.s32.totalorder %s94, %s95
      %p107 = scmp.eq.s32.totalorder %s22, 1
      %p108 = por %p106, %p107
      %p110 = scmp.ne.s32.totalorder %s95, %s109
      %p111 = scmp.eq.s32.totalorder %s22, 0
      %p112 = por %p110, %p111
      %s114 = sadd.s32 %s113, 1
      %p117 = scmp.eq.s32.totalorder %s16, 1
      %p118 = scmp.ne.s32.totalorder %s113, %s115
      %p119 = scmp.eq.s32.totalorder %s16, 0
      %p120 = por %p118, %p119
      %p121 = scmp.ne.s32.totalorder %s113, %s115
      %p122 = scmp.eq.s32.totalorder %s21, 1
      %p123 = por %p121, %p122
      %p124 = scmp.ne.s32.totalorder %s115, %s116
      %p125 = scmp.eq.s32.totalorder %s21, 0
      %p126 = por %p124, %p125
      %p127 = scmp.ne.s32.totalorder %s115, %s116
      %p128 = scmp.eq.s32.totalorder %s22, 1
      %p129 = por %p127, %p128
      %p131 = scmp.ne.s32.totalorder %s116, %s130
      %p132 = scmp.eq.s32.totalorder %s22, 0
      %p133 = por %p131, %p132
      %s135 = sadd.s32 %s134, 1
      %p138 = scmp.eq.s32.totalorder %s16, 1
      %p139 = scmp.ne.s32.totalorder %s134, %s136
      %p140 = scmp.eq.s32.totalorder %s16, 0
      %p141 = por %p139, %p140
      %p142 = scmp.ne.s32.totalorder %s134, %s136
      %p143 = scmp.eq.s32.totalorder %s21, 1
      %p144 = por %p142, %p143
      %p145 = scmp.ne.s32.totalorder %s136, %s137
      %p146 = scmp.eq.s32.totalorder %s21, 0
      %p147 = por %p145, %p146
      %p148 = scmp.ne.s32.totalorder %s136, %s137
      %p149 = scmp.eq.s32.totalorder %s22, 1
      %p150 = por %p148, %p149
      %p152 = scmp.ne.s32.totalorder %s137, %s151
      %p153 = scmp.eq.s32.totalorder %s22, 0
      %p154 = por %p152, %p153
      %s156 = sadd.s32 %s155, 1
      %p159 = scmp.eq.s32.totalorder %s16, 1
      %p160 = scmp.ne.s32.totalorder %s155, %s157
      %p161 = scmp.eq.s32.totalorder %s16, 0
      %p162 = por %p160, %p161
      %p163 = scmp.ne.s32.totalorder %s155, %s157
      %p164 = scmp.eq.s32.totalorder %s21, 1
      %p165 = por %p163, %p164
      %p166 = scmp.ne.s32.totalorder %s157, %s158
      %p167 = scmp.eq.s32.totalorder %s21, 0
      %p168 = por %p166, %p167
      %p169 = scmp.ne.s32.totalorder %s157, %s158
      %p170 = scmp.eq.s32.totalorder %s22, 1
      %p171 = por %p169, %p170
      %p173 = scmp.ne.s32.totalorder %s158, %s172
      %p174 = scmp.eq.s32.totalorder %s22, 0
      %p175 = por %p173, %p174
      %s176 = ssub.s32 %s16, %s23
      %p177 = scmp.eq.s32.totalorder %s176, 0
      %s179 = sadd.s32 %s178, 1
      %s180 = scalar_select %p177, %s178, %s179
      %p183 = pneg %p177
      %p184 = scmp.eq.s32.totalorder %s16, 1
      %p185 = por %p183, %p184
      %p186 = scmp.ne.s32.totalorder %s178, %s181
      %p187 = scmp.eq.s32.totalorder %s16, 0
      %p188 = por %p186, %p187
      %p189 = scmp.ne.s32.totalorder %s178, %s181
      %p190 = scmp.eq.s32.totalorder %s21, 1
      %p191 = por %p189, %p190
      %p192 = scmp.ne.s32.totalorder %s181, %s182
      %p193 = scmp.eq.s32.totalorder %s21, 0
      %p194 = por %p192, %p193
      %p195 = scmp.ne.s32.totalorder %s181, %s182
      %p196 = scmp.eq.s32.totalorder %s22, 1
      %p197 = por %p195, %p196
      %p199 = scmp.ne.s32.totalorder %s182, %s198
      %p200 = scmp.eq.s32.totalorder %s22, 0
      %p201 = por %p199, %p200
      %p202 = scmp.le.s32.totalorder 1, %s16
      %p203 = scmp.lt.s32.totalorder %s16, 3
      %p204 = pnand %p202, %p203
      %p205 = pneg %p204
      // Predicated region
      $region9: #{tpu_custom_call.1} parent=5 // pred_check
        _
      $region10: #{tpu_custom_call.1} parent=5 // pred_check_branch
        %207 = sbr.rel (%p204) target = $region12
      $region11: #{tpu_custom_call.1} parent=5 // pred_region
        %s208 = ssub.s32 %s16, 1
        // Predicated region
        $region13: #{tpu_custom_call.1} parent=11 // pred_check
          %p209 = pneg %p63
        $region14: #{tpu_custom_call.1} parent=11 // pred_check_branch
          %211 = sbr.rel (%p209) target = $region16
        $region15: #{tpu_custom_call.1} parent=11 // pred_region
          _
        $region16: #{tpu_custom_call.1} parent=11 // pred_fallthru
          _
        // Predicated region
        $region17: #{tpu_custom_call.1} parent=11 // pred_check
          %p212 = pneg %p84
        $region18: #{tpu_custom_call.1} parent=11 // pred_check_branch
          %214 = sbr.rel (%p212) target = $region20
        $region19: #{tpu_custom_call.1} parent=11 // pred_region
          _
        $region20: #{tpu_custom_call.1} parent=11 // pred_fallthru
          _
        // Predicated region
        $region21: #{tpu_custom_call.1} parent=11 // pred_check
          %p215 = pneg %p105
        $region22: #{tpu_custom_call.1} parent=11 // pred_check_branch
          %217 = sbr.rel (%p215) target = $region24
        $region23: #{tpu_custom_call.1} parent=11 // pred_region
          _
        $region24: #{tpu_custom_call.1} parent=11 // pred_fallthru
          _
        // Predicated region
        $region25: #{tpu_custom_call.1} parent=11 // pred_check
          %p218 = pneg %p126
        $region26: #{tpu_custom_call.1} parent=11 // pred_check_branch
          %220 = sbr.rel (%p218) target = $region28
        $region27: #{tpu_custom_call.1} parent=11 // pred_region
          _
        $region28: #{tpu_custom_call.1} parent=11 // pred_fallthru
          _
        // Predicated region
        $region29: #{tpu_custom_call.1} parent=11 // pred_check
          %p221 = pneg %p147
        $region30: #{tpu_custom_call.1} parent=11 // pred_check_branch
          %223 = sbr.rel (%p221) target = $region32
        $region31: #{tpu_custom_call.1} parent=11 // pred_region
          _
        $region32: #{tpu_custom_call.1} parent=11 // pred_fallthru
          _
        // Predicated region
        $region33: #{tpu_custom_call.1} parent=11 // pred_check
          %p224 = pneg %p168
        $region34: #{tpu_custom_call.1} parent=11 // pred_check_branch
          %226 = sbr.rel (%p224) target = $region36
        $region35: #{tpu_custom_call.1} parent=11 // pred_region
          _
        $region36: #{tpu_custom_call.1} parent=11 // pred_fallthru
          _
      $region12: #{tpu_custom_call.1} parent=5 // pred_fallthru
        _
      %p227 = scmp.lt.s32.totalorder %s16, 2
      // Predicated region
      $region37: #{tpu_custom_call.1} parent=5 // pred_check
        %p228 = pneg %p227
      $region38: #{tpu_custom_call.1} parent=5 // pred_check_branch
        %230 = sbr.rel (%p228) target = $region40
      $region39: #{tpu_custom_call.1} parent=5 // pred_region
        // Predicated region
        $region41: #{tpu_custom_call.1} parent=39 // pred_check
          %p231 = pneg %p36
        $region42: #{tpu_custom_call.1} parent=39 // pred_check_branch
          %233 = sbr.rel (%p231) target = $region44
        $region43: #{tpu_custom_call.1} parent=39 // pred_region
          %p234 = scmp.lt.s32.totalorder %s16, 1
          %s235 = scalar_select %p234, %s16, 1
          %s236 = smul.addr %s235, 32
          %s237 = smul.addr %s236, 8
          %s238 = scalar_lea.vmem %s0, %s237
        $region44: #{tpu_custom_call.1} parent=39 // pred_fallthru
          _
      $region40: #{tpu_custom_call.1} parent=5 // pred_fallthru
        _
      %p239 = scmp.le.s32.totalorder 1, %s16
      %p240 = scmp.lt.s32.totalorder %s16, 3
      %p241 = pnand %p239, %p240
      %p242 = pneg %p241
      // Predicated region
      $region45: #{tpu_custom_call.1} parent=5 // pred_check
        _
      $region46: #{tpu_custom_call.1} parent=5 // pred_check_branch
        %244 = sbr.rel (%p241) target = $region48
      $region47: #{tpu_custom_call.1} parent=5 // pred_region
        %s245 = ssub.s32 %s16, 1
        %p246 = scmp.lt.s32.totalorder %s21, 1
        %s247 = scalar_select %p246, %s21, 1
        %s248 = smul.addr %s247, 32
        %s249 = smul.addr %s248, 8
        %s250 = scalar_lea.vmem %s0, %s249
        %p251 = pneg %p42
        %p252 = pneg %p39
        %p253 = pneg %p63
        %p254 = pneg %p60
        %p255 = pneg %p84
        %p256 = pneg %p81
        %p257 = pneg %p105
        %p258 = pneg %p102
        %p259 = pneg %p126
        %p260 = pneg %p123
        %p261 = pneg %p147
        %p262 = pneg %p144
        %p263 = pneg %p168
        %p264 = pneg %p165
        %p265 = pneg %p194
        %p266 = pneg %p191
        %s267 = sand.u32 %s181, 1
        %s268 = scalar_lea.sflag [#allocation4], %s267
        %s269 = sand.u32 %s181, 1
        %s270 = smul.addr %s269, 256
        %s271 = scalar_lea.vmem [#allocation3], %s270
        %p272 = scmp.lt.s32.totalorder %s21, 1
        %s273 = scalar_select %p272, %s21, 1
        %s274 = smul.addr %s273, 32
        %s275 = smul.addr %s274, 8
        %s276 = scalar_lea.vmem %s0, %s275
        %v278 = vld [vmem:[%s276] sm:$0xff]
        %v279 = vld [vmem:[%s276 + $0x8] sm:$0xff]
        %v280 = vld [vmem:[%s276 + $0x10] sm:$0xff]
        %v281 = vld [vmem:[%s276 + $0x18] sm:$0xff]
        %v282 = vld [vmem:[%s276 + $0x20] sm:$0xff]
        %v283 = vld [vmem:[%s276 + $0x28] sm:$0xff]
        %v284 = vld [vmem:[%s276 + $0x30] sm:$0xff]
        %v285 = vld [vmem:[%s276 + $0x38] sm:$0xff]
        %v286 = vld [vmem:[%s276 + $0x40] sm:$0xff]
        %v287 = vld [vmem:[%s276 + $0x48] sm:$0xff]
        %v288 = vld [vmem:[%s276 + $0x50] sm:$0xff]
        %v289 = vld [vmem:[%s276 + $0x58] sm:$0xff]
        %v290 = vld [vmem:[%s276 + $0x60] sm:$0xff]
        %v291 = vld [vmem:[%s276 + $0x68] sm:$0xff]
        %v292 = vld [vmem:[%s276 + $0x70] sm:$0xff]
        %v293 = vld [vmem:[%s276 + $0x78] sm:$0xff]
        %v294 = vld [vmem:[%s276 + $0x80] sm:$0xff]
        %v295 = vld [vmem:[%s276 + $0x88] sm:$0xff]
        %v296 = vld [vmem:[%s276 + $0x90] sm:$0xff]
        %v297 = vld [vmem:[%s276 + $0x98] sm:$0xff]
        %v298 = vld [vmem:[%s276 + $0xa0] sm:$0xff]
        %v299 = vld [vmem:[%s276 + $0xa8] sm:$0xff]
        %v300 = vld [vmem:[%s276 + $0xb0] sm:$0xff]
        %v301 = vld [vmem:[%s276 + $0xb8] sm:$0xff]
        %v302 = vld [vmem:[%s276 + $0xc0] sm:$0xff]
        %v303 = vld [vmem:[%s276 + $0xc8] sm:$0xff]
        %v304 = vld [vmem:[%s276 + $0xd0] sm:$0xff]
        %v305 = vld [vmem:[%s276 + $0xd8] sm:$0xff]
        %v306 = vld [vmem:[%s276 + $0xe0] sm:$0xff]
        %v307 = vld [vmem:[%s276 + $0xe8] sm:$0xff]
        %v308 = vld [vmem:[%s276 + $0xf0] sm:$0xff]
        %v309 = vld [vmem:[%s276 + $0xf8] sm:$0xff]
        %v310 = vpack.c.bf16 %v279, %v278
        %v311 = vpack.c.bf16 %v281, %v280
        %v312 = vpack.c.bf16 %v283, %v282
        %v313 = vpack.c.bf16 %v285, %v284
        %v314 = vpack.c.bf16 %v287, %v286
        %v315 = vpack.c.bf16 %v289, %v288
        %v316 = vpack.c.bf16 %v291, %v290
        %v317 = vpack.c.bf16 %v293, %v292
        %v318 = vpack.c.bf16 %v295, %v294
        %v319 = vpack.c.bf16 %v297, %v296
        %v320 = vpack.c.bf16 %v299, %v298
        %v321 = vpack.c.bf16 %v301, %v300
        %v322 = vpack.c.bf16 %v303, %v302
        %v323 = vpack.c.bf16 %v305, %v304
        %v324 = vpack.c.bf16 %v307, %v306
        %v325 = vpack.c.bf16 %v309, %v308
        %v326 = vld [vmem:[%s1] sm:$0xf]
        %v327 = vld [vmem:[%s1 + $0x4] sm:$0xf]
        %v328 = vld [vmem:[%s1 + $0x8] sm:$0xf]
        %v329 = vld [vmem:[%s1 + $0xc] sm:$0xf]
        %v330 = vld [vmem:[%s2] sm:$0x1]
        %v332 = vlaneseq
        %v333 = vshrl.u32 %v332, 7
        %v334 = vsub.s32 0, %v333
        %v335 = vrot.slane %v330, %v334
        %v341 = vunpack.c.l.b16 %v326
        %v342 = vunpack.c.l.b16 %v327
        %v343 = vunpack.c.l.b16 %v328
        %v344 = vunpack.c.l.b16 %v329
        %v345 = vpack.c.b16 %v342, %v341
        %v346 = vpack.c.b16 %v344, %v343
        %vm349 = vcmask 261120
        %v351 = vsel %vm349, %v310, 0
        %v354 = vsel %vm349, %v311, 0
        %v357 = vsel %vm349, %v312, 0
        %v360 = vsel %vm349, %v313, 0
        %v363 = vsel %vm349, %v314, 0
        %v366 = vsel %vm349, %v315, 0
        %v369 = vsel %vm349, %v316, 0
        %v372 = vsel %vm349, %v317, 0
        %v375 = vsel %vm349, %v318, 0
        %v378 = vsel %vm349, %v319, 0
        %v381 = vsel %vm349, %v320, 0
        %v384 = vsel %vm349, %v321, 0
        %v387 = vsel %vm349, %v322, 0
        %v390 = vsel %vm349, %v323, 0
        %v393 = vsel %vm349, %v324, 0
        %v396 = vsel %vm349, %v325, 0
        %398 = vmatprep.subr.bf16.mxu0 0
        %399 = vmatpush1.bf16.msra.mxu0 %v345
        %400 = vmatprep.subr.bf16.mxu0 0
        %401 = vmatpush1.bf16.msra.mxu0 %v346
        %402 = vmatprep.subr.bf16.mxu0 0
        %403 = vmatpush1.bf16.msra.mxu0 0
        %404 = vmatprep.subr.bf16.mxu0 0
        %405 = vmatpush1.bf16.msra.mxu0 0
        %406 = vmatprep.subr.bf16.mxu0 0
        %407 = vmatpush1.bf16.msra.mxu0 0
        %408 = vmatprep.subr.bf16.mxu0 0
        %409 = vmatpush1.bf16.msra.mxu0 0
        %410 = vmatprep.subr.bf16.mxu0 0
        %411 = vmatpush1.bf16.msra.mxu0 0
        %412 = vmatprep.subr.bf16.mxu0 0
        %413 = vmatpush1.bf16.msra.mxu0 0
        %414 = vmatprep.subr.bf16.mxu0 0
        %415 = vmatpush1.bf16.msra.mxu0 0
        %416 = vmatprep.subr.bf16.mxu0 0
        %417 = vmatpush1.bf16.msra.mxu0 0
        %418 = vmatprep.subr.bf16.mxu0 0
        %419 = vmatpush1.bf16.msra.mxu0 0
        %420 = vmatprep.subr.bf16.mxu0 0
        %421 = vmatpush1.bf16.msra.mxu0 0
        %422 = vmatprep.subr.bf16.mxu0 0
        %423 = vmatpush1.bf16.msra.mxu0 0
        %424 = vmatprep.subr.bf16.mxu0 0
        %425 = vmatpush1.bf16.msra.mxu0 0
        %426 = vmatprep.subr.bf16.mxu0 0
        %427 = vmatpush1.bf16.msra.mxu0 0
        %428 = vmatprep.subr.bf16.mxu0 0
        %429 = vmatpush1.bf16.msra.mxu0 0
        %430 = vmatprep.mubr.bf16.mxu0 0
        %431 = vmatmul.mubr.bf16.gmra.mrb[0].mxu0 %v351
        %v432 = vpop.f32.mrb[0].mxu0
        %v433 = vadd.f32 %v335, %v432
        %v434 = vpop.f32.mrb[0].mxu0
        %v435 = vpop.f32.mrb[0].mxu0
        %v436 = vadd.f32 %v335, %v435
        %v437 = vpop.f32.mrb[0].mxu0
        %438 = vmatprep.mubr.bf16.mxu0 0
        %439 = vmatmul.mubr.bf16.gmra.mrb[0].mxu0 %v354
        %v440 = vpop.f32.mrb[0].mxu0
        %v441 = vadd.f32 %v335, %v440
        %v442 = vpop.f32.mrb[0].mxu0
        %v443 = vpop.f32.mrb[0].mxu0
        %v444 = vadd.f32 %v335, %v443
        %v445 = vpop.f32.mrb[0].mxu0
        %446 = vmatprep.mubr.bf16.mxu0 0
        %447 = vmatmul.mubr.bf16.gmra.mrb[0].mxu0 %v357
        %v448 = vpop.f32.mrb[0].mxu0
        %v449 = vadd.f32 %v335, %v448
        %v450 = vpop.f32.mrb[0].mxu0
        %v451 = vpop.f32.mrb[0].mxu0
        %v452 = vadd.f32 %v335, %v451
        %v453 = vpop.f32.mrb[0].mxu0
        %454 = vmatprep.mubr.bf16.mxu0 0
        %455 = vmatmul.mubr.bf16.gmra.mrb[0].mxu0 %v360
        %v456 = vpop.f32.mrb[0].mxu0
        %v457 = vadd.f32 %v335, %v456
        %v458 = vpop.f32.mrb[0].mxu0
        %v459 = vpop.f32.mrb[0].mxu0
        %v460 = vadd.f32 %v335, %v459
        %v461 = vpop.f32.mrb[0].mxu0
        %462 = vmatprep.mubr.bf16.mxu0 0
        %463 = vmatmul.mubr.bf16.gmra.mrb[0].mxu0 %v363
        %v464 = vpop.f32.mrb[0].mxu0
        %v465 = vadd.f32 %v335, %v464
        %v466 = vpop.f32.mrb[0].mxu0
        %v467 = vpop.f32.mrb[0].mxu0
        %v468 = vadd.f32 %v335, %v467
        %v469 = vpop.f32.mrb[0].mxu0
        %470 = vmatprep.mubr.bf16.mxu0 0
        %471 = vmatmul.mubr.bf16.gmra.mrb[0].mxu0 %v366
        %v472 = vpop.f32.mrb[0].mxu0
        %v473 = vadd.f32 %v335, %v472
        %v474 = vpop.f32.mrb[0].mxu0
        %v475 = vpop.f32.mrb[0].mxu0
        %v476 = vadd.f32 %v335, %v475
        %v477 = vpop.f32.mrb[0].mxu0
        %478 = vmatprep.mubr.bf16.mxu0 0
        %479 = vmatmul.mubr.bf16.gmra.mrb[0].mxu0 %v369
        %v480 = vpop.f32.mrb[0].mxu0
        %v481 = vadd.f32 %v335, %v480
        %v482 = vpop.f32.mrb[0].mxu0
        %v483 = vpop.f32.mrb[0].mxu0
        %v484 = vadd.f32 %v335, %v483
        %v485 = vpop.f32.mrb[0].mxu0
        %486 = vmatprep.mubr.bf16.mxu0 0
        %487 = vmatmul.mubr.bf16.gmra.mrb[0].mxu0 %v372
        %v488 = vpop.f32.mrb[0].mxu0
        %v489 = vadd.f32 %v335, %v488
        %v490 = vpop.f32.mrb[0].mxu0
        %v491 = vpop.f32.mrb[0].mxu0
        %v492 = vadd.f32 %v335, %v491
        %v493 = vpop.f32.mrb[0].mxu0
        %494 = vmatprep.mubr.bf16.mxu0 0
        %495 = vmatmul.mubr.bf16.gmra.mrb[0].mxu0 %v375
        %v496 = vpop.f32.mrb[0].mxu0
        %v497 = vadd.f32 %v335, %v496
        %v498 = vpop.f32.mrb[0].mxu0
        %v499 = vpop.f32.mrb[0].mxu0
        %v500 = vadd.f32 %v335, %v499
        %v501 = vpop.f32.mrb[0].mxu0
        %502 = vmatprep.mubr.bf16.mxu0 0
        %503 = vmatmul.mubr.bf16.gmra.mrb[0].mxu0 %v378
        %v504 = vpop.f32.mrb[0].mxu0
        %v505 = vadd.f32 %v335, %v504
        %v506 = vpop.f32.mrb[0].mxu0
        %v507 = vpop.f32.mrb[0].mxu0
        %v508 = vadd.f32 %v335, %v507
        %v509 = vpop.f32.mrb[0].mxu0
        %510 = vmatprep.mubr.bf16.mxu0 0
        %511 = vmatmul.mubr.bf16.gmra.mrb[0].mxu0 %v381
        %v512 = vpop.f32.mrb[0].mxu0
        %v513 = vadd.f32 %v335, %v512
        %v514 = vpop.f32.mrb[0].mxu0
        %v515 = vpop.f32.mrb[0].mxu0
        %v516 = vadd.f32 %v335, %v515
        %v517 = vpop.f32.mrb[0].mxu0
        %518 = vmatprep.mubr.bf16.mxu0 0
        %519 = vmatmul.mubr.bf16.gmra.mrb[0].mxu0 %v384
        %v520 = vpop.f32.mrb[0].mxu0
        %v521 = vadd.f32 %v335, %v520
        %v522 = vpop.f32.mrb[0].mxu0
        %v523 = vpop.f32.mrb[0].mxu0
        %v524 = vadd.f32 %v335, %v523
        %v525 = vpop.f32.mrb[0].mxu0
        %526 = vmatprep.mubr.bf16.mxu0 0
        %527 = vmatmul.mubr.bf16.gmra.mrb[0].mxu0 %v387
        %v528 = vpop.f32.mrb[0].mxu0
        %v529 = vadd.f32 %v335, %v528
        %v530 = vpop.f32.mrb[0].mxu0
        %v531 = vpop.f32.mrb[0].mxu0
        %v532 = vadd.f32 %v335, %v531
        %v533 = vpop.f32.mrb[0].mxu0
        %534 = vmatprep.mubr.bf16.mxu0 0
        %535 = vmatmul.mubr.bf16.gmra.mrb[0].mxu0 %v390
        %v536 = vpop.f32.mrb[0].mxu0
        %v537 = vadd.f32 %v335, %v536
        %v538 = vpop.f32.mrb[0].mxu0
        %v539 = vpop.f32.mrb[0].mxu0
        %v540 = vadd.f32 %v335, %v539
        %v541 = vpop.f32.mrb[0].mxu0
        %542 = vmatprep.mubr.bf16.mxu0 0
        %543 = vmatmul.mubr.bf16.gmra.mrb[0].mxu0 %v393
        %v544 = vpop.f32.mrb[0].mxu0
        %v545 = vadd.f32 %v335, %v544
        %v546 = vpop.f32.mrb[0].mxu0
        %v547 = vpop.f32.mrb[0].mxu0
        %v548 = vadd.f32 %v335, %v547
        %v549 = vpop.f32.mrb[0].mxu0
        %550 = vmatprep.mubr.bf16.mxu0 0
        %551 = vmatmul.mubr.bf16.gmra.mrb[0].mxu0 %v396
        %v552 = vpop.f32.mrb[0].mxu0
        %v553 = vadd.f32 %v335, %v552
        %v554 = vpop.f32.mrb[0].mxu0
        %v555 = vpop.f32.mrb[0].mxu0
        %v556 = vadd.f32 %v335, %v555
        %v557 = vpop.f32.mrb[0].mxu0
        %558 = vdwg.mxu0
        %559 = vst [vmem:[#allocation2] sm:$0xff] 0.0
        %560 = vst [vmem:[#allocation2 + $0x8] sm:$0xff] 0.0
        %561 = vst [vmem:[#allocation2 + $0x10] sm:$0xff] 0.0
        %562 = vst [vmem:[#allocation2 + $0x118] sm:$0xff] 0.0
        %563 = vst [vmem:[#allocation2 + $0x120] sm:$0xff] 0.0
        %564 = vst [vmem:[#allocation2 + $0x128] sm:$0xff] 0.0
        %565 = vst [vmem:[#allocation2 + $0x18] sm:$0xff] %v433
        %566 = vst [vmem:[#allocation2 + $0x20] sm:$0xff] %v436
        %567 = vst [vmem:[#allocation2 + $0x28] sm:$0xff] %v441
        %568 = vst [vmem:[#allocation2 + $0x30] sm:$0xff] %v444
        %569 = vst [vmem:[#allocation2 + $0x38] sm:$0xff] %v449
        %570 = vst [vmem:[#allocation2 + $0x40] sm:$0xff] %v452
        %571 = vst [vmem:[#allocation2 + $0x48] sm:$0xff] %v457
        %572 = vst [vmem:[#allocation2 + $0x50] sm:$0xff] %v460
        %573 = vst [vmem:[#allocation2 + $0x58] sm:$0xff] %v465
        %574 = vst [vmem:[#allocation2 + $0x60] sm:$0xff] %v468
        %575 = vst [vmem:[#allocation2 + $0x68] sm:$0xff] %v473
        %576 = vst [vmem:[#allocation2 + $0x70] sm:$0xff] %v476
        %577 = vst [vmem:[#allocation2 + $0x78] sm:$0xff] %v481
        %578 = vst [vmem:[#allocation2 + $0x80] sm:$0xff] %v484
        %579 = vst [vmem:[#allocation2 + $0x88] sm:$0xff] %v489
        %580 = vst [vmem:[#allocation2 + $0x90] sm:$0xff] %v492
        %581 = vst [vmem:[#allocation2 + $0x98] sm:$0xff] %v497
        %582 = vst [vmem:[#allocation2 + $0xa0] sm:$0xff] %v500
        %583 = vst [vmem:[#allocation2 + $0xa8] sm:$0xff] %v505
        %584 = vst [vmem:[#allocation2 + $0xb0] sm:$0xff] %v508
        %585 = vst [vmem:[#allocation2 + $0xb8] sm:$0xff] %v513
        %586 = vst [vmem:[#allocation2 + $0xc0] sm:$0xff] %v516
        %587 = vst [vmem:[#allocation2 + $0xc8] sm:$0xff] %v521
        %588 = vst [vmem:[#allocation2 + $0xd0] sm:$0xff] %v524
        %589 = vst [vmem:[#allocation2 + $0xd8] sm:$0xff] %v529
        %590 = vst [vmem:[#allocation2 + $0xe0] sm:$0xff] %v532
        %591 = vst [vmem:[#allocation2 + $0xe8] sm:$0xff] %v537
        %592 = vst [vmem:[#allocation2 + $0xf0] sm:$0xff] %v540
        %593 = vst [vmem:[#allocation2 + $0xf8] sm:$0xff] %v545
        %594 = vst [vmem:[#allocation2 + $0x100] sm:$0xff] %v548
        %595 = vst [vmem:[#allocation2 + $0x108] sm:$0xff] %v553
        %596 = vst [vmem:[#allocation2 + $0x110] sm:$0xff] %v556
        %v597 = vlaneseq
        %v598 = vshrl.u32 %v597, 7
        %v599 = vadd.s32 %v598, 8
        %v600 = vadd.s32 %v598, 16
        %v601 = vadd.s32 %v598, 24
        %v602 = vadd.s32 %v598, 32
        %v603 = vadd.s32 %v598, 40
        %v604 = vadd.s32 %v598, 48
        %v605 = vadd.s32 %v598, 56
        %v606 = vadd.s32 %v598, 64
        %v607 = vadd.s32 %v598, 72
        %v608 = vadd.s32 %v598, 80
        %v609 = vadd.s32 %v598, 88
        %v610 = vadd.s32 %v598, 96
        %v611 = vadd.s32 %v598, 104
        %v612 = vadd.s32 %v598, 112
        %v613 = vadd.s32 %v598, 120
        %v614 = vadd.s32 %v598, 128
        %v615 = vadd.s32 %v598, 136
        %v616 = vadd.s32 %v598, 144
        %v617 = vadd.s32 %v598, 152
        %v618 = vadd.s32 %v598, 160
        %v619 = vadd.s32 %v598, 168
        %v620 = vadd.s32 %v598, 176
        %v621 = vadd.s32 %v598, 184
        %v622 = vadd.s32 %v598, 192
        %v623 = vadd.s32 %v598, 200
        %v624 = vadd.s32 %v598, 208
        %v625 = vadd.s32 %v598, 216
        %v626 = vadd.s32 %v598, 224
        %v627 = vadd.s32 %v598, 232
        %v628 = vadd.s32 %v598, 240
        %v629 = vadd.s32 %v598, 248
        %vm630 = vcmp.lt.s32.totalorder %v598, 0
        %v631 = vsub.s32 0, %v598
        %v632 = vsel %vm630, %v631, %v598
        %v633 = vshrl.u32 %v632, 4
        %v634 = vand.u32 %v632, 15
        %v635 = vsub.s32 0, %v634
        %v636 = vsel %vm630, %v635, %v634
        %vm637 = vcmp.lt.s32.totalorder %v599, 0
        %v638 = vsub.s32 0, %v599
        %v639 = vsel %vm637, %v638, %v599
        %v640 = vshrl.u32 %v639, 4
        %v641 = vand.u32 %v639, 15
        %v642 = vsub.s32 0, %v641
        %v643 = vsel %vm637, %v642, %v641
        %vm644 = vcmp.lt.s32.totalorder %v600, 0
        %v645 = vsub.s32 0, %v600
        %v646 = vsel %vm644, %v645, %v600
        %v647 = vshrl.u32 %v646, 4
        %v648 = vand.u32 %v646, 15
        %v649 = vsub.s32 0, %v648
        %v650 = vsel %vm644, %v649, %v648
        %vm651 = vcmp.lt.s32.totalorder %v601, 0
        %v652 = vsub.s32 0, %v601
        %v653 = vsel %vm651, %v652, %v601
        %v654 = vshrl.u32 %v653, 4
        %v655 = vand.u32 %v653, 15
        %v656 = vsub.s32 0, %v655
        %v657 = vsel %vm651, %v656, %v655
        %vm658 = vcmp.lt.s32.totalorder %v602, 0
        %v659 = vsub.s32 0, %v602
        %v660 = vsel %vm658, %v659, %v602
        %v661 = vshrl.u32 %v660, 4
        %v662 = vand.u32 %v660, 15
        %v663 = vsub.s32 0, %v662
        %v664 = vsel %vm658, %v663, %v662
        %vm665 = vcmp.lt.s32.totalorder %v603, 0
        %v666 = vsub.s32 0, %v603
        %v667 = vsel %vm665, %v666, %v603
        %v668 = vshrl.u32 %v667, 4
        %v669 = vand.u32 %v667, 15
        %v670 = vsub.s32 0, %v669
        %v671 = vsel %vm665, %v670, %v669
        %vm672 = vcmp.lt.s32.totalorder %v604, 0
        %v673 = vsub.s32 0, %v604
        %v674 = vsel %vm672, %v673, %v604
        %v675 = vshrl.u32 %v674, 4
        %v676 = vand.u32 %v674, 15
        %v677 = vsub.s32 0, %v676
        %v678 = vsel %vm672, %v677, %v676
        %vm679 = vcmp.lt.s32.totalorder %v605, 0
        %v680 = vsub.s32 0, %v605
        %v681 = vsel %vm679, %v680, %v605
        %v682 = vshrl.u32 %v681, 4
        %v683 = vand.u32 %v681, 15
        %v684 = vsub.s32 0, %v683
        %v685 = vsel %vm679, %v684, %v683
        %vm686 = vcmp.lt.s32.totalorder %v606, 0
        %v687 = vsub.s32 0, %v606
        %v688 = vsel %vm686, %v687, %v606
        %v689 = vshrl.u32 %v688, 4
        %v690 = vand.u32 %v688, 15
        %v691 = vsub.s32 0, %v690
        %v692 = vsel %vm686, %v691, %v690
        %vm693 = vcmp.lt.s32.totalorder %v607, 0
        %v694 = vsub.s32 0, %v607
        %v695 = vsel %vm693, %v694, %v607
        %v696 = vshrl.u32 %v695, 4
        %v697 = vand.u32 %v695, 15
        %v698 = vsub.s32 0, %v697
        %v699 = vsel %vm693, %v698, %v697
        %vm700 = vcmp.lt.s32.totalorder %v608, 0
        %v701 = vsub.s32 0, %v608
        %v702 = vsel %vm700, %v701, %v608
        %v703 = vshrl.u32 %v702, 4
        %v704 = vand.u32 %v702, 15
        %v705 = vsub.s32 0, %v704
        %v706 = vsel %vm700, %v705, %v704
        %vm707 = vcmp.lt.s32.totalorder %v609, 0
        %v708 = vsub.s32 0, %v609
        %v709 = vsel %vm707, %v708, %v609
        %v710 = vshrl.u32 %v709, 4
        %v711 = vand.u32 %v709, 15
        %v712 = vsub.s32 0, %v711
        %v713 = vsel %vm707, %v712, %v711
        %vm714 = vcmp.lt.s32.totalorder %v610, 0
        %v715 = vsub.s32 0, %v610
        %v716 = vsel %vm714, %v715, %v610
        %v717 = vshrl.u32 %v716, 4
        %v718 = vand.u32 %v716, 15
        %v719 = vsub.s32 0, %v718
        %v720 = vsel %vm714, %v719, %v718
        %vm721 = vcmp.lt.s32.totalorder %v611, 0
        %v722 = vsub.s32 0, %v611
        %v723 = vsel %vm721, %v722, %v611
        %v724 = vshrl.u32 %v723, 4
        %v725 = vand.u32 %v723, 15
        %v726 = vsub.s32 0, %v725
        %v727 = vsel %vm721, %v726, %v725
        %vm728 = vcmp.lt.s32.totalorder %v612, 0
        %v729 = vsub.s32 0, %v612
        %v730 = vsel %vm728, %v729, %v612
        %v731 = vshrl.u32 %v730, 4
        %v732 = vand.u32 %v730, 15
        %v733 = vsub.s32 0, %v732
        %v734 = vsel %vm728, %v733, %v732
        %vm735 = vcmp.lt.s32.totalorder %v613, 0
        %v736 = vsub.s32 0, %v613
        %v737 = vsel %vm735, %v736, %v613
        %v738 = vshrl.u32 %v737, 4
        %v739 = vand.u32 %v737, 15
        %v740 = vsub.s32 0, %v739
        %v741 = vsel %vm735, %v740, %v739
        %vm742 = vcmp.lt.s32.totalorder %v614, 0
        %v743 = vsub.s32 0, %v614
        %v744 = vsel %vm742, %v743, %v614
        %v745 = vshrl.u32 %v744, 4
        %v746 = vand.u32 %v744, 15
        %v747 = vsub.s32 0, %v746
        %v748 = vsel %vm742, %v747, %v746
        %vm749 = vcmp.lt.s32.totalorder %v615, 0
        %v750 = vsub.s32 0, %v615
        %v751 = vsel %vm749, %v750, %v615
        %v752 = vshrl.u32 %v751, 4
        %v753 = vand.u32 %v751, 15
        %v754 = vsub.s32 0, %v753
        %v755 = vsel %vm749, %v754, %v753
        %vm756 = vcmp.lt.s32.totalorder %v616, 0
        %v757 = vsub.s32 0, %v616
        %v758 = vsel %vm756, %v757, %v616
        %v759 = vshrl.u32 %v758, 4
        %v760 = vand.u32 %v758, 15
        %v761 = vsub.s32 0, %v760
        %v762 = vsel %vm756, %v761, %v760
        %vm763 = vcmp.lt.s32.totalorder %v617, 0
        %v764 = vsub.s32 0, %v617
        %v765 = vsel %vm763, %v764, %v617
        %v766 = vshrl.u32 %v765, 4
        %v767 = vand.u32 %v765, 15
        %v768 = vsub.s32 0, %v767
        %v769 = vsel %vm763, %v768, %v767
        %vm770 = vcmp.lt.s32.totalorder %v618, 0
        %v771 = vsub.s32 0, %v618
        %v772 = vsel %vm770, %v771, %v618
        %v773 = vshrl.u32 %v772, 4
        %v774 = vand.u32 %v772, 15
        %v775 = vsub.s32 0, %v774
        %v776 = vsel %vm770, %v775, %v774
        %vm777 = vcmp.lt.s32.totalorder %v619, 0
        %v778 = vsub.s32 0, %v619
        %v779 = vsel %vm777, %v778, %v619
        %v780 = vshrl.u32 %v779, 4
        %v781 = vand.u32 %v779, 15
        %v782 = vsub.s32 0, %v781
        %v783 = vsel %vm777, %v782, %v781
        %vm784 = vcmp.lt.s32.totalorder %v620, 0
        %v785 = vsub.s32 0, %v620
        %v786 = vsel %vm784, %v785, %v620
        %v787 = vshrl.u32 %v786, 4
        %v788 = vand.u32 %v786, 15
        %v789 = vsub.s32 0, %v788
        %v790 = vsel %vm784, %v789, %v788
        %vm791 = vcmp.lt.s32.totalorder %v621, 0
        %v792 = vsub.s32 0, %v621
        %v793 = vsel %vm791, %v792, %v621
        %v794 = vshrl.u32 %v793, 4
        %v795 = vand.u32 %v793, 15
        %v796 = vsub.s32 0, %v795
        %v797 = vsel %vm791, %v796, %v795
        %vm798 = vcmp.lt.s32.totalorder %v622, 0
        %v799 = vsub.s32 0, %v622
        %v800 = vsel %vm798, %v799, %v622
        %v801 = vshrl.u32 %v800, 4
        %v802 = vand.u32 %v800, 15
        %v803 = vsub.s32 0, %v802
        %v804 = vsel %vm798, %v803, %v802
        %vm805 = vcmp.lt.s32.totalorder %v623, 0
        %v806 = vsub.s32 0, %v623
        %v807 = vsel %vm805, %v806, %v623
        %v808 = vshrl.u32 %v807, 4
        %v809 = vand.u32 %v807, 15
        %v810 = vsub.s32 0, %v809
        %v811 = vsel %vm805, %v810, %v809
        %vm812 = vcmp.lt.s32.totalorder %v624, 0
        %v813 = vsub.s32 0, %v624
        %v814 = vsel %vm812, %v813, %v624
        %v815 = vshrl.u32 %v814, 4
        %v816 = vand.u32 %v814, 15
        %v817 = vsub.s32 0, %v816
        %v818 = vsel %vm812, %v817, %v816
        %vm819 = vcmp.lt.s32.totalorder %v625, 0
        %v820 = vsub.s32 0, %v625
        %v821 = vsel %vm819, %v820, %v625
        %v822 = vshrl.u32 %v821, 4
        %v823 = vand.u32 %v821, 15
        %v824 = vsub.s32 0, %v823
        %v825 = vsel %vm819, %v824, %v823
        %vm826 = vcmp.lt.s32.totalorder %v626, 0
        %v827 = vsub.s32 0, %v626
        %v828 = vsel %vm826, %v827, %v626
        %v829 = vshrl.u32 %v828, 4
        %v830 = vand.u32 %v828, 15
        %v831 = vsub.s32 0, %v830
        %v832 = vsel %vm826, %v831, %v830
        %vm833 = vcmp.lt.s32.totalorder %v627, 0
        %v834 = vsub.s32 0, %v627
        %v835 = vsel %vm833, %v834, %v627
        %v836 = vshrl.u32 %v835, 4
        %v837 = vand.u32 %v835, 15
        %v838 = vsub.s32 0, %v837
        %v839 = vsel %vm833, %v838, %v837
        %vm840 = vcmp.lt.s32.totalorder %v628, 0
        %v841 = vsub.s32 0, %v628
        %v842 = vsel %vm840, %v841, %v628
        %v843 = vshrl.u32 %v842, 4
        %v844 = vand.u32 %v842, 15
        %v845 = vsub.s32 0, %v844
        %v846 = vsel %vm840, %v845, %v844
        %vm847 = vcmp.lt.s32.totalorder %v629, 0
        %v848 = vsub.s32 0, %v629
        %v849 = vsel %vm847, %v848, %v629
        %v850 = vshrl.u32 %v849, 4
        %v851 = vand.u32 %v849, 15
        %v852 = vsub.s32 0, %v851
        %v853 = vsel %vm847, %v852, %v851
        %vm854 = vcmp.ne.s32.totalorder %v636, 0
        %vm855 = vcmp.ne.s32.totalorder %v643, 0
        %vm856 = vcmp.ne.s32.totalorder %v650, 0
        %vm857 = vcmp.ne.s32.totalorder %v657, 0
        %vm858 = vcmp.ne.s32.totalorder %v664, 0
        %vm859 = vcmp.ne.s32.totalorder %v671, 0
        %vm860 = vcmp.ne.s32.totalorder %v678, 0
        %vm861 = vcmp.ne.s32.totalorder %v685, 0
        %vm862 = vcmp.ne.s32.totalorder %v692, 0
        %vm863 = vcmp.ne.s32.totalorder %v699, 0
        %vm864 = vcmp.ne.s32.totalorder %v706, 0
        %vm865 = vcmp.ne.s32.totalorder %v713, 0
        %vm866 = vcmp.ne.s32.totalorder %v720, 0
        %vm867 = vcmp.ne.s32.totalorder %v727, 0
        %vm868 = vcmp.ne.s32.totalorder %v734, 0
        %vm869 = vcmp.ne.s32.totalorder %v741, 0
        %vm870 = vcmp.ne.s32.totalorder %v748, 0
        %vm871 = vcmp.ne.s32.totalorder %v755, 0
        %vm872 = vcmp.ne.s32.totalorder %v762, 0
        %vm873 = vcmp.ne.s32.totalorder %v769, 0
        %vm874 = vcmp.ne.s32.totalorder %v776, 0
        %vm875 = vcmp.ne.s32.totalorder %v783, 0
        %vm876 = vcmp.ne.s32.totalorder %v790, 0
        %vm877 = vcmp.ne.s32.totalorder %v797, 0
        %vm878 = vcmp.ne.s32.totalorder %v804, 0
        %vm879 = vcmp.ne.s32.totalorder %v811, 0
        %vm880 = vcmp.ne.s32.totalorder %v818, 0
        %vm881 = vcmp.ne.s32.totalorder %v825, 0
        %vm882 = vcmp.ne.s32.totalorder %v832, 0
        %vm883 = vcmp.ne.s32.totalorder %v839, 0
        %vm884 = vcmp.ne.s32.totalorder %v846, 0
        %vm885 = vcmp.ne.s32.totalorder %v853, 0
        %vm886 = vcmp.lt.s32.totalorder %v636, 0
        %vm887 = vcmp.lt.s32.totalorder %v643, 0
        %vm888 = vcmp.lt.s32.totalorder %v650, 0
        %vm889 = vcmp.lt.s32.totalorder %v657, 0
        %vm890 = vcmp.lt.s32.totalorder %v664, 0
        %vm891 = vcmp.lt.s32.totalorder %v671, 0
        %vm892 = vcmp.lt.s32.totalorder %v678, 0
        %vm893 = vcmp.lt.s32.totalorder %v685, 0
        %vm894 = vcmp.lt.s32.totalorder %v692, 0
        %vm895 = vcmp.lt.s32.totalorder %v699, 0
        %vm896 = vcmp.lt.s32.totalorder %v706, 0
        %vm897 = vcmp.lt.s32.totalorder %v713, 0
        %vm898 = vcmp.lt.s32.totalorder %v720, 0
        %vm899 = vcmp.lt.s32.totalorder %v727, 0
        %vm900 = vcmp.lt.s32.totalorder %v734, 0
        %vm901 = vcmp.lt.s32.totalorder %v741, 0
        %vm902 = vcmp.lt.s32.totalorder %v748, 0
        %vm903 = vcmp.lt.s32.totalorder %v755, 0
        %vm904 = vcmp.lt.s32.totalorder %v762, 0
        %vm905 = vcmp.lt.s32.totalorder %v769, 0
        %vm906 = vcmp.lt.s32.totalorder %v776, 0
        %vm907 = vcmp.lt.s32.totalorder %v783, 0
        %vm908 = vcmp.lt.s32.totalorder %v790, 0
        %vm909 = vcmp.lt.s32.totalorder %v797, 0
        %vm910 = vcmp.lt.s32.totalorder %v804, 0
        %vm911 = vcmp.lt.s32.totalorder %v811, 0
        %vm912 = vcmp.lt.s32.totalorder %v818, 0
        %vm913 = vcmp.lt.s32.totalorder %v825, 0
        %vm914 = vcmp.lt.s32.totalorder %v832, 0
        %vm915 = vcmp.lt.s32.totalorder %v839, 0
        %vm916 = vcmp.lt.s32.totalorder %v846, 0
        %vm917 = vcmp.lt.s32.totalorder %v853, 0
        %vm918 = vmand %vm886, %vm854
        %vm919 = vmand %vm887, %vm855
        %vm920 = vmand %vm888, %vm856
        %vm921 = vmand %vm889, %vm857
        %vm922 = vmand %vm890, %vm858
        %vm923 = vmand %vm891, %vm859
        %vm924 = vmand %vm892, %vm860
        %vm925 = vmand %vm893, %vm861
        %vm926 = vmand %vm894, %vm862
        %vm927 = vmand %vm895, %vm863
        %vm928 = vmand %vm896, %vm864
        %vm929 = vmand %vm897, %vm865
        %vm930 = vmand %vm898, %vm866
        %vm931 = vmand %vm899, %vm867
        %vm932 = vmand %vm900, %vm868
        %vm933 = vmand %vm901, %vm869
        %vm934 = vmand %vm902, %vm870
        %vm935 = vmand %vm903, %vm871
        %vm936 = vmand %vm904, %vm872
        %vm937 = vmand %vm905, %vm873
        %vm938 = vmand %vm906, %vm874
        %vm939 = vmand %vm907, %vm875
        %vm940 = vmand %vm908, %vm876
        %vm941 = vmand %vm909, %vm877
        %vm942 = vmand %vm910, %vm878
        %vm943 = vmand %vm911, %vm879
        %vm944 = vmand %vm912, %vm880
        %vm945 = vmand %vm913, %vm881
        %vm946 = vmand %vm914, %vm882
        %vm947 = vmand %vm915, %vm883
        %vm948 = vmand %vm916, %vm884
        %vm949 = vmand %vm917, %vm885
        %v950 = vadd.s32 %v636, 16
        %v951 = vadd.s32 %v643, 16
        %v952 = vadd.s32 %v650, 16
        %v953 = vadd.s32 %v657, 16
        %v954 = vadd.s32 %v664, 16
        %v955 = vadd.s32 %v671, 16
        %v956 = vadd.s32 %v678, 16
        %v957 = vadd.s32 %v685, 16
        %v958 = vadd.s32 %v692, 16
        %v959 = vadd.s32 %v699, 16
        %v960 = vadd.s32 %v706, 16
        %v961 = vadd.s32 %v713, 16
        %v962 = vadd.s32 %v720, 16
        %v963 = vadd.s32 %v727, 16
        %v964 = vadd.s32 %v734, 16
        %v965 = vadd.s32 %v741, 16
        %v966 = vadd.s32 %v748, 16
        %v967 = vadd.s32 %v755, 16
        %v968 = vadd.s32 %v762, 16
        %v969 = vadd.s32 %v769, 16
        %v970 = vadd.s32 %v776, 16
        %v971 = vadd.s32 %v783, 16
        %v972 = vadd.s32 %v790, 16
        %v973 = vadd.s32 %v797, 16
        %v974 = vadd.s32 %v804, 16
        %v975 = vadd.s32 %v811, 16
        %v976 = vadd.s32 %v818, 16
        %v977 = vadd.s32 %v825, 16
        %v978 = vadd.s32 %v832, 16
        %v979 = vadd.s32 %v839, 16
        %v980 = vadd.s32 %v846, 16
        %v981 = vadd.s32 %v853, 16
        %v982 = vsel %vm918, %v950, %v636
        %v983 = vsel %vm919, %v951, %v643
        %v984 = vsel %vm920, %v952, %v650
        %v985 = vsel %vm921, %v953, %v657
        %v986 = vsel %vm922, %v954, %v664
        %v987 = vsel %vm923, %v955, %v671
        %v988 = vsel %vm924, %v956, %v678
        %v989 = vsel %vm925, %v957, %v685
        %v990 = vsel %vm926, %v958, %v692
        %v991 = vsel %vm927, %v959, %v699
        %v992 = vsel %vm928, %v960, %v706
        %v993 = vsel %vm929, %v961, %v713
        %v994 = vsel %vm930, %v962, %v720
        %v995 = vsel %vm931, %v963, %v727
        %v996 = vsel %vm932, %v964, %v734
        %v997 = vsel %vm933, %v965, %v741
        %v998 = vsel %vm934, %v966, %v748
        %v999 = vsel %vm935, %v967, %v755
        %v1000 = vsel %vm936, %v968, %v762
        %v1001 = vsel %vm937, %v969, %v769
        %v1002 = vsel %vm938, %v970, %v776
        %v1003 = vsel %vm939, %v971, %v783
        %v1004 = vsel %vm940, %v972, %v790
        %v1005 = vsel %vm941, %v973, %v797
        %v1006 = vsel %vm942, %v974, %v804
        %v1007 = vsel %vm943, %v975, %v811
        %v1008 = vsel %vm944, %v976, %v818
        %v1009 = vsel %vm945, %v977, %v825
        %v1010 = vsel %vm946, %v978, %v832
        %v1011 = vsel %vm947, %v979, %v839
        %v1012 = vsel %vm948, %v980, %v846
        %v1013 = vsel %vm949, %v981, %v853
        %vm1014 = vcmp.gt.s32.totalorder %v982, 0
        %vm1015 = vcmp.gt.s32.totalorder %v983, 0
        %vm1016 = vcmp.gt.s32.totalorder %v984, 0
        %vm1017 = vcmp.gt.s32.totalorder %v985, 0
        %vm1018 = vcmp.gt.s32.totalorder %v986, 0
        %vm1019 = vcmp.gt.s32.totalorder %v987, 0
        %vm1020 = vcmp.gt.s32.totalorder %v988, 0
        %vm1021 = vcmp.gt.s32.totalorder %v989, 0
        %vm1022 = vcmp.gt.s32.totalorder %v990, 0
        %vm1023 = vcmp.gt.s32.totalorder %v991, 0
        %vm1024 = vcmp.gt.s32.totalorder %v992, 0
        %vm1025 = vcmp.gt.s32.totalorder %v993, 0
        %vm1026 = vcmp.gt.s32.totalorder %v994, 0
        %vm1027 = vcmp.gt.s32.totalorder %v995, 0
        %vm1028 = vcmp.gt.s32.totalorder %v996, 0
        %vm1029 = vcmp.gt.s32.totalorder %v997, 0
        %vm1030 = vcmp.gt.s32.totalorder %v998, 0
        %vm1031 = vcmp.gt.s32.totalorder %v999, 0
        %vm1032 = vcmp.gt.s32.totalorder %v1000, 0
        %vm1033 = vcmp.gt.s32.totalorder %v1001, 0
        %vm1034 = vcmp.gt.s32.totalorder %v1002, 0
        %vm1035 = vcmp.gt.s32.totalorder %v1003, 0
        %vm1036 = vcmp.gt.s32.totalorder %v1004, 0
        %vm1037 = vcmp.gt.s32.totalorder %v1005, 0
        %vm1038 = vcmp.gt.s32.totalorder %v1006, 0
        %vm1039 = vcmp.gt.s32.totalorder %v1007, 0
        %vm1040 = vcmp.gt.s32.totalorder %v1008, 0
        %vm1041 = vcmp.gt.s32.totalorder %v1009, 0
        %vm1042 = vcmp.gt.s32.totalorder %v1010, 0
        %vm1043 = vcmp.gt.s32.totalorder %v1011, 0
        %vm1044 = vcmp.gt.s32.totalorder %v1012, 0
        %vm1045 = vcmp.gt.s32.totalorder %v1013, 0
        %vm1046 = vcmp.lt.s32.totalorder %v982, 15
        %vm1047 = vcmp.lt.s32.totalorder %v983, 15
        %vm1048 = vcmp.lt.s32.totalorder %v984, 15
        %vm1049 = vcmp.lt.s32.totalorder %v985, 15
        %vm1050 = vcmp.lt.s32.totalorder %v986, 15
        %vm1051 = vcmp.lt.s32.totalorder %v987, 15
        %vm1052 = vcmp.lt.s32.totalorder %v988, 15
        %vm1053 = vcmp.lt.s32.totalorder %v989, 15
        %vm1054 = vcmp.lt.s32.totalorder %v990, 15
        %vm1055 = vcmp.lt.s32.totalorder %v991, 15
        %vm1056 = vcmp.lt.s32.totalorder %v992, 15
        %vm1057 = vcmp.lt.s32.totalorder %v993, 15
        %vm1058 = vcmp.lt.s32.totalorder %v994, 15
        %vm1059 = vcmp.lt.s32.totalorder %v995, 15
        %vm1060 = vcmp.lt.s32.totalorder %v996, 15
        %vm1061 = vcmp.lt.s32.totalorder %v997, 15
        %vm1062 = vcmp.lt.s32.totalorder %v998, 15
        %vm1063 = vcmp.lt.s32.totalorder %v999, 15
        %vm1064 = vcmp.lt.s32.totalorder %v1000, 15
        %vm1065 = vcmp.lt.s32.totalorder %v1001, 15
        %vm1066 = vcmp.lt.s32.totalorder %v1002, 15
        %vm1067 = vcmp.lt.s32.totalorder %v1003, 15
        %vm1068 = vcmp.lt.s32.totalorder %v1004, 15
        %vm1069 = vcmp.lt.s32.totalorder %v1005, 15
        %vm1070 = vcmp.lt.s32.totalorder %v1006, 15
        %vm1071 = vcmp.lt.s32.totalorder %v1007, 15
        %vm1072 = vcmp.lt.s32.totalorder %v1008, 15
        %vm1073 = vcmp.lt.s32.totalorder %v1009, 15
        %vm1074 = vcmp.lt.s32.totalorder %v1010, 15
        %vm1075 = vcmp.lt.s32.totalorder %v1011, 15
        %vm1076 = vcmp.lt.s32.totalorder %v1012, 15
        %vm1077 = vcmp.lt.s32.totalorder %v1013, 15
        %v1078 = vld [vmem:[%s3] sm:$0xff]
        %v1079 = vld [vmem:[%s3 + $0x8] sm:$0x1]
        %v1080 = vlaneseq
        %v1081 = vshrl.u32 %v1080, 7
        %v1082 = vsub.s32 4, %v1081
        %v1083 = vrot.slane %v1078, %v1082
        %v1084 = vmul.f32 %v433, %v1083
        %v1085 = vmul.f32 %v436, %v1083
        %v1086 = vmul.f32 %v441, %v1083
        %v1087 = vmul.f32 %v444, %v1083
        %v1088 = vmul.f32 %v449, %v1083
        %v1089 = vmul.f32 %v452, %v1083
        %v1090 = vmul.f32 %v457, %v1083
        %v1091 = vmul.f32 %v460, %v1083
        %v1092 = vmul.f32 %v465, %v1083
        %v1093 = vmul.f32 %v468, %v1083
        %v1094 = vmul.f32 %v473, %v1083
        %v1095 = vmul.f32 %v476, %v1083
        %v1096 = vmul.f32 %v481, %v1083
        %v1097 = vmul.f32 %v484, %v1083
        %v1098 = vmul.f32 %v489, %v1083
        %v1099 = vmul.f32 %v492, %v1083
        %v1100 = vmul.f32 %v497, %v1083
        %v1101 = vmul.f32 %v500, %v1083
        %v1102 = vmul.f32 %v505, %v1083
        %v1103 = vmul.f32 %v508, %v1083
        %v1104 = vmul.f32 %v513, %v1083
        %v1105 = vmul.f32 %v516, %v1083
        %v1106 = vmul.f32 %v521, %v1083
        %v1107 = vmul.f32 %v524, %v1083
        %v1108 = vmul.f32 %v529, %v1083
        %v1109 = vmul.f32 %v532, %v1083
        %v1110 = vmul.f32 %v537, %v1083
        %v1111 = vmul.f32 %v540, %v1083
        %v1112 = vmul.f32 %v545, %v1083
        %v1113 = vmul.f32 %v548, %v1083
        %v1114 = vmul.f32 %v553, %v1083
        %v1115 = vmul.f32 %v556, %v1083
        %v1116 = vld [vmem:[#allocation2 + $0x8] sm:$0xff]
        %v1117 = vld [vmem:[#allocation2 + $0x10] sm:$0xff]
        %v1118 = vld [vmem:[#allocation2 + $0x18] sm:$0xff]
        %v1119 = vld [vmem:[#allocation2 + $0x20] sm:$0xff]
        %v1120 = vld [vmem:[#allocation2 + $0x28] sm:$0xff]
        %v1121 = vld [vmem:[#allocation2 + $0x30] sm:$0xff]
        %v1122 = vld [vmem:[#allocation2 + $0x38] sm:$0xff]
        %v1123 = vld [vmem:[#allocation2 + $0x40] sm:$0xff]
        %v1124 = vld [vmem:[#allocation2 + $0x48] sm:$0xff]
        %v1125 = vld [vmem:[#allocation2 + $0x50] sm:$0xff]
        %v1126 = vld [vmem:[#allocation2 + $0x58] sm:$0xff]
        %v1127 = vld [vmem:[#allocation2 + $0x60] sm:$0xff]
        %v1128 = vld [vmem:[#allocation2 + $0x68] sm:$0xff]
        %v1129 = vld [vmem:[#allocation2 + $0x70] sm:$0xff]
        %v1130 = vld [vmem:[#allocation2 + $0x78] sm:$0xff]
        %v1131 = vld [vmem:[#allocation2 + $0x80] sm:$0xff]
        %v1132 = vld [vmem:[#allocation2 + $0x88] sm:$0xff]
        %v1133 = vld [vmem:[#allocation2 + $0x90] sm:$0xff]
        %v1134 = vld [vmem:[#allocation2 + $0x98] sm:$0xff]
        %v1135 = vld [vmem:[#allocation2 + $0xa0] sm:$0xff]
        %v1136 = vld [vmem:[#allocation2 + $0xa8] sm:$0xff]
        %v1137 = vld [vmem:[#allocation2 + $0xb0] sm:$0xff]
        %v1138 = vld [vmem:[#allocation2 + $0xb8] sm:$0xff]
        %v1139 = vld [vmem:[#allocation2 + $0xc0] sm:$0xff]
        %v1140 = vld [vmem:[#allocation2 + $0xc8] sm:$0xff]
        %v1141 = vld [vmem:[#allocation2 + $0xd0] sm:$0xff]
        %v1142 = vld [vmem:[#allocation2 + $0xd8] sm:$0xff]
        %v1143 = vld [vmem:[#allocation2 + $0xe0] sm:$0xff]
        %v1144 = vld [vmem:[#allocation2 + $0xe8] sm:$0xff]
        %v1145 = vld [vmem:[#allocation2 + $0xf0] sm:$0xff]
        %v1146 = vld [vmem:[#allocation2 + $0xf8] sm:$0xff]
        %v1147 = vld [vmem:[#allocation2 + $0x100] sm:$0xff]
        %v1148 = vlaneseq
        %v1149 = vshrl.u32 %v1148, 7
        %v1150 = vsub.s32 1, %v1149
        %v1151 = vrot.slane %v1078, %v1150
        %v1152 = vmul.f32 %v1116, %v1151
        %v1153 = vmul.f32 %v1117, %v1151
        %v1154 = vmul.f32 %v1118, %v1151
        %v1155 = vmul.f32 %v1119, %v1151
        %v1156 = vmul.f32 %v1120, %v1151
        %v1157 = vmul.f32 %v1121, %v1151
        %v1158 = vmul.f32 %v1122, %v1151
        %v1159 = vmul.f32 %v1123, %v1151
        %v1160 = vmul.f32 %v1124, %v1151
        %v1161 = vmul.f32 %v1125, %v1151
        %v1162 = vmul.f32 %v1126, %v1151
        %v1163 = vmul.f32 %v1127, %v1151
        %v1164 = vmul.f32 %v1128, %v1151
        %v1165 = vmul.f32 %v1129, %v1151
        %v1166 = vmul.f32 %v1130, %v1151
        %v1167 = vmul.f32 %v1131, %v1151
        %v1168 = vmul.f32 %v1132, %v1151
        %v1169 = vmul.f32 %v1133, %v1151
        %v1170 = vmul.f32 %v1134, %v1151
        %v1171 = vmul.f32 %v1135, %v1151
        %v1172 = vmul.f32 %v1136, %v1151
        %v1173 = vmul.f32 %v1137, %v1151
        %v1174 = vmul.f32 %v1138, %v1151
        %v1175 = vmul.f32 %v1139, %v1151
        %v1176 = vmul.f32 %v1140, %v1151
        %v1177 = vmul.f32 %v1141, %v1151
        %v1178 = vmul.f32 %v1142, %v1151
        %v1179 = vmul.f32 %v1143, %v1151
        %v1180 = vmul.f32 %v1144, %v1151
        %v1181 = vmul.f32 %v1145, %v1151
        %v1182 = vmul.f32 %v1146, %v1151
        %v1183 = vmul.f32 %v1147, %v1151
        %v1184 = vadd.f32 %v1084, %v1152
        %v1185 = vadd.f32 %v1085, %v1153
        %v1186 = vadd.f32 %v1086, %v1154
        %v1187 = vadd.f32 %v1087, %v1155
        %v1188 = vadd.f32 %v1088, %v1156
        %v1189 = vadd.f32 %v1089, %v1157
        %v1190 = vadd.f32 %v1090, %v1158
        %v1191 = vadd.f32 %v1091, %v1159
        %v1192 = vadd.f32 %v1092, %v1160
        %v1193 = vadd.f32 %v1093, %v1161
        %v1194 = vadd.f32 %v1094, %v1162
        %v1195 = vadd.f32 %v1095, %v1163
        %v1196 = vadd.f32 %v1096, %v1164
        %v1197 = vadd.f32 %v1097, %v1165
        %v1198 = vadd.f32 %v1098, %v1166
        %v1199 = vadd.f32 %v1099, %v1167
        %v1200 = vadd.f32 %v1100, %v1168
        %v1201 = vadd.f32 %v1101, %v1169
        %v1202 = vadd.f32 %v1102, %v1170
        %v1203 = vadd.f32 %v1103, %v1171
        %v1204 = vadd.f32 %v1104, %v1172
        %v1205 = vadd.f32 %v1105, %v1173
        %v1206 = vadd.f32 %v1106, %v1174
        %v1207 = vadd.f32 %v1107, %v1175
        %v1208 = vadd.f32 %v1108, %v1176
        %v1209 = vadd.f32 %v1109, %v1177
        %v1210 = vadd.f32 %v1110, %v1178
        %v1211 = vadd.f32 %v1111, %v1179
        %v1212 = vadd.f32 %v1112, %v1180
        %v1213 = vadd.f32 %v1113, %v1181
        %v1214 = vadd.f32 %v1114, %v1182
        %v1215 = vadd.f32 %v1115, %v1183
        %v1216 = vld [vmem:[#allocation2 + $0x108] sm:$0xff]
        %v1217 = vld [vmem:[#allocation2 + $0x110] sm:$0xff]
        %v1218 = vld [vmem:[#allocation2 + $0x118] sm:$0xff]
        %v1219 = vld [vmem:[#allocation2 + $0x120] sm:$0xff]
        %v1220 = vlaneseq
        %v1221 = vshrl.u32 %v1220, 7
        %v1222 = vsub.s32 7, %v1221
        %v1223 = vrot.slane %v1078, %v1222
        %v1224 = vmul.f32 %v1120, %v1223
        %v1225 = vmul.f32 %v1121, %v1223
        %v1226 = vmul.f32 %v1122, %v1223
        %v1227 = vmul.f32 %v1123, %v1223
        %v1228 = vmul.f32 %v1124, %v1223
        %v1229 = vmul.f32 %v1125, %v1223
        %v1230 = vmul.f32 %v1126, %v1223
        %v1231 = vmul.f32 %v1127, %v1223
        %v1232 = vmul.f32 %v1128, %v1223
        %v1233 = vmul.f32 %v1129, %v1223
        %v1234 = vmul.f32 %v1130, %v1223
        %v1235 = vmul.f32 %v1131, %v1223
        %v1236 = vmul.f32 %v1132, %v1223
        %v1237 = vmul.f32 %v1133, %v1223
        %v1238 = vmul.f32 %v1134, %v1223
        %v1239 = vmul.f32 %v1135, %v1223
        %v1240 = vmul.f32 %v1136, %v1223
        %v1241 = vmul.f32 %v1137, %v1223
        %v1242 = vmul.f32 %v1138, %v1223
        %v1243 = vmul.f32 %v1139, %v1223
        %v1244 = vmul.f32 %v1140, %v1223
        %v1245 = vmul.f32 %v1141, %v1223
        %v1246 = vmul.f32 %v1142, %v1223
        %v1247 = vmul.f32 %v1143, %v1223
        %v1248 = vmul.f32 %v1144, %v1223
        %v1249 = vmul.f32 %v1145, %v1223
        %v1250 = vmul.f32 %v1146, %v1223
        %v1251 = vmul.f32 %v1147, %v1223
        %v1252 = vmul.f32 %v1216, %v1223
        %v1253 = vmul.f32 %v1217, %v1223
        %v1254 = vmul.f32 %v1218, %v1223
        %v1255 = vmul.f32 %v1219, %v1223
        %v1256 = vadd.f32 %v1184, %v1224
        %v1257 = vadd.f32 %v1185, %v1225
        %v1258 = vadd.f32 %v1186, %v1226
        %v1259 = vadd.f32 %v1187, %v1227
        %v1260 = vadd.f32 %v1188, %v1228
        %v1261 = vadd.f32 %v1189, %v1229
        %v1262 = vadd.f32 %v1190, %v1230
        %v1263 = vadd.f32 %v1191, %v1231
        %v1264 = vadd.f32 %v1192, %v1232
        %v1265 = vadd.f32 %v1193, %v1233
        %v1266 = vadd.f32 %v1194, %v1234
        %v1267 = vadd.f32 %v1195, %v1235
        %v1268 = vadd.f32 %v1196, %v1236
        %v1269 = vadd.f32 %v1197, %v1237
        %v1270 = vadd.f32 %v1198, %v1238
        %v1271 = vadd.f32 %v1199, %v1239
        %v1272 = vadd.f32 %v1200, %v1240
        %v1273 = vadd.f32 %v1201, %v1241
        %v1274 = vadd.f32 %v1202, %v1242
        %v1275 = vadd.f32 %v1203, %v1243
        %v1276 = vadd.f32 %v1204, %v1244
        %v1277 = vadd.f32 %v1205, %v1245
        %v1278 = vadd.f32 %v1206, %v1246
        %v1279 = vadd.f32 %v1207, %v1247
        %v1280 = vadd.f32 %v1208, %v1248
        %v1281 = vadd.f32 %v1209, %v1249
        %v1282 = vadd.f32 %v1210, %v1250
        %v1283 = vadd.f32 %v1211, %v1251
        %v1284 = vadd.f32 %v1212, %v1252
        %v1285 = vadd.f32 %v1213, %v1253
        %v1286 = vadd.f32 %v1214, %v1254
        %v1287 = vadd.f32 %v1215, %v1255
        %v1288 = vld [vmem:[#allocation2 + $0x7] sm:$0xff]
        %v1289 = vld [vmem:[#allocation2 + $0xf] sm:$0xff]
        %v1290 = vld [vmem:[#allocation2 + $0x17] sm:$0xff]
        %v1291 = vld [vmem:[#allocation2 + $0x1f] sm:$0xff]
        %v1292 = vld [vmem:[#allocation2 + $0x27] sm:$0xff]
        %v1293 = vld [vmem:[#allocation2 + $0x2f] sm:$0xff]
        %v1294 = vld [vmem:[#allocation2 + $0x37] sm:$0xff]
        %v1295 = vld [vmem:[#allocation2 + $0x3f] sm:$0xff]
        %v1296 = vld [vmem:[#allocation2 + $0x47] sm:$0xff]
        %v1297 = vld [vmem:[#allocation2 + $0x4f] sm:$0xff]
        %v1298 = vld [vmem:[#allocation2 + $0x57] sm:$0xff]
        %v1299 = vld [vmem:[#allocation2 + $0x5f] sm:$0xff]
        %v1300 = vld [vmem:[#allocation2 + $0x67] sm:$0xff]
        %v1301 = vld [vmem:[#allocation2 + $0x6f] sm:$0xff]
        %v1302 = vld [vmem:[#allocation2 + $0x77] sm:$0xff]
        %v1303 = vld [vmem:[#allocation2 + $0x7f] sm:$0xff]
        %v1304 = vld [vmem:[#allocation2 + $0x87] sm:$0xff]
        %v1305 = vld [vmem:[#allocation2 + $0x8f] sm:$0xff]
        %v1306 = vld [vmem:[#allocation2 + $0x97] sm:$0xff]
        %v1307 = vld [vmem:[#allocation2 + $0x9f] sm:$0xff]
        %v1308 = vld [vmem:[#allocation2 + $0xa7] sm:$0xff]
        %v1309 = vld [vmem:[#allocation2 + $0xaf] sm:$0xff]
        %v1310 = vld [vmem:[#allocation2 + $0xb7] sm:$0xff]
        %v1311 = vld [vmem:[#allocation2 + $0xbf] sm:$0xff]
        %v1312 = vld [vmem:[#allocation2 + $0xc7] sm:$0xff]
        %v1313 = vld [vmem:[#allocation2 + $0xcf] sm:$0xff]
        %v1314 = vld [vmem:[#allocation2 + $0xd7] sm:$0xff]
        %v1315 = vld [vmem:[#allocation2 + $0xdf] sm:$0xff]
        %v1316 = vld [vmem:[#allocation2 + $0xe7] sm:$0xff]
        %v1317 = vld [vmem:[#allocation2 + $0xef] sm:$0xff]
        %v1318 = vld [vmem:[#allocation2 + $0xf7] sm:$0xff]
        %v1319 = vld [vmem:[#allocation2 + $0xff] sm:$0xff]
        %v1320 = vlaneseq
        %v1321 = vshrl.u32 %v1320, 7
        %v1322 = vsub.s32 0, %v1321
        %v1323 = vrot.slane %v1078, %v1322
        %v1324 = vmul.f32 %v1288, %v1323
        %v1325 = vmul.f32 %v1289, %v1323
        %v1326 = vmul.f32 %v1290, %v1323
        %v1327 = vmul.f32 %v1291, %v1323
        %v1328 = vmul.f32 %v1292, %v1323
        %v1329 = vmul.f32 %v1293, %v1323
        %v1330 = vmul.f32 %v1294, %v1323
        %v1331 = vmul.f32 %v1295, %v1323
        %v1332 = vmul.f32 %v1296, %v1323
        %v1333 = vmul.f32 %v1297, %v1323
        %v1334 = vmul.f32 %v1298, %v1323
        %v1335 = vmul.f32 %v1299, %v1323
        %v1336 = vmul.f32 %v1300, %v1323
        %v1337 = vmul.f32 %v1301, %v1323
        %v1338 = vmul.f32 %v1302, %v1323
        %v1339 = vmul.f32 %v1303, %v1323
        %v1340 = vmul.f32 %v1304, %v1323
        %v1341 = vmul.f32 %v1305, %v1323
        %v1342 = vmul.f32 %v1306, %v1323
        %v1343 = vmul.f32 %v1307, %v1323
        %v1344 = vmul.f32 %v1308, %v1323
        %v1345 = vmul.f32 %v1309, %v1323
        %v1346 = vmul.f32 %v1310, %v1323
        %v1347 = vmul.f32 %v1311, %v1323
        %v1348 = vmul.f32 %v1312, %v1323
        %v1349 = vmul.f32 %v1313, %v1323
        %v1350 = vmul.f32 %v1314, %v1323
        %v1351 = vmul.f32 %v1315, %v1323
        %v1352 = vmul.f32 %v1316, %v1323
        %v1353 = vmul.f32 %v1317, %v1323
        %v1354 = vmul.f32 %v1318, %v1323
        %v1355 = vmul.f32 %v1319, %v1323
        %v1356 = vld [vmem:[#allocation2 + $0x107] sm:$0xff]
        %v1357 = vld [vmem:[#allocation2 + $0x10f] sm:$0xff]
        %v1358 = vlaneseq
        %v1359 = vshrl.u32 %v1358, 7
        %v1360 = vsub.s32 3, %v1359
        %v1361 = vrot.slane %v1078, %v1360
        %v1362 = vmul.f32 %v1290, %v1361
        %v1363 = vmul.f32 %v1291, %v1361
        %v1364 = vmul.f32 %v1292, %v1361
        %v1365 = vmul.f32 %v1293, %v1361
        %v1366 = vmul.f32 %v1294, %v1361
        %v1367 = vmul.f32 %v1295, %v1361
        %v1368 = vmul.f32 %v1296, %v1361
        %v1369 = vmul.f32 %v1297, %v1361
        %v1370 = vmul.f32 %v1298, %v1361
        %v1371 = vmul.f32 %v1299, %v1361
        %v1372 = vmul.f32 %v1300, %v1361
        %v1373 = vmul.f32 %v1301, %v1361
        %v1374 = vmul.f32 %v1302, %v1361
        %v1375 = vmul.f32 %v1303, %v1361
        %v1376 = vmul.f32 %v1304, %v1361
        %v1377 = vmul.f32 %v1305, %v1361
        %v1378 = vmul.f32 %v1306, %v1361
        %v1379 = vmul.f32 %v1307, %v1361
        %v1380 = vmul.f32 %v1308, %v1361
        %v1381 = vmul.f32 %v1309, %v1361
        %v1382 = vmul.f32 %v1310, %v1361
        %v1383 = vmul.f32 %v1311, %v1361
        %v1384 = vmul.f32 %v1312, %v1361
        %v1385 = vmul.f32 %v1313, %v1361
        %v1386 = vmul.f32 %v1314, %v1361
        %v1387 = vmul.f32 %v1315, %v1361
        %v1388 = vmul.f32 %v1316, %v1361
        %v1389 = vmul.f32 %v1317, %v1361
        %v1390 = vmul.f32 %v1318, %v1361
        %v1391 = vmul.f32 %v1319, %v1361
        %v1392 = vmul.f32 %v1356, %v1361
        %v1393 = vmul.f32 %v1357, %v1361
        %v1394 = vadd.f32 %v1324, %v1362
        %v1395 = vadd.f32 %v1325, %v1363
        %v1396 = vadd.f32 %v1326, %v1364
        %v1397 = vadd.f32 %v1327, %v1365
        %v1398 = vadd.f32 %v1328, %v1366
        %v1399 = vadd.f32 %v1329, %v1367
        %v1400 = vadd.f32 %v1330, %v1368
        %v1401 = vadd.f32 %v1331, %v1369
        %v1402 = vadd.f32 %v1332, %v1370
        %v1403 = vadd.f32 %v1333, %v1371
        %v1404 = vadd.f32 %v1334, %v1372
        %v1405 = vadd.f32 %v1335, %v1373
        %v1406 = vadd.f32 %v1336, %v1374
        %v1407 = vadd.f32 %v1337, %v1375
        %v1408 = vadd.f32 %v1338, %v1376
        %v1409 = vadd.f32 %v1339, %v1377
        %v1410 = vadd.f32 %v1340, %v1378
        %v1411 = vadd.f32 %v1341, %v1379
        %v1412 = vadd.f32 %v1342, %v1380
        %v1413 = vadd.f32 %v1343, %v1381
        %v1414 = vadd.f32 %v1344, %v1382
        %v1415 = vadd.f32 %v1345, %v1383
        %v1416 = vadd.f32 %v1346, %v1384
        %v1417 = vadd.f32 %v1347, %v1385
        %v1418 = vadd.f32 %v1348, %v1386
        %v1419 = vadd.f32 %v1349, %v1387
        %v1420 = vadd.f32 %v1350, %v1388
        %v1421 = vadd.f32 %v1351, %v1389
        %v1422 = vadd.f32 %v1352, %v1390
        %v1423 = vadd.f32 %v1353, %v1391
        %v1424 = vadd.f32 %v1354, %v1392
        %v1425 = vadd.f32 %v1355, %v1393
        %v1426 = vld [vmem:[#allocation2 + $0x117] sm:$0xff]
        %v1427 = vld [vmem:[#allocation2 + $0x11f] sm:$0xff]
        %v1428 = vlaneseq
        %v1429 = vshrl.u32 %v1428, 7
        %v1430 = vsub.s32 6, %v1429
        %v1431 = vrot.slane %v1078, %v1430
        %v1432 = vmul.f32 %v1292, %v1431
        %v1433 = vmul.f32 %v1293, %v1431
        %v1434 = vmul.f32 %v1294, %v1431
        %v1435 = vmul.f32 %v1295, %v1431
        %v1436 = vmul.f32 %v1296, %v1431
        %v1437 = vmul.f32 %v1297, %v1431
        %v1438 = vmul.f32 %v1298, %v1431
        %v1439 = vmul.f32 %v1299, %v1431
        %v1440 = vmul.f32 %v1300, %v1431
        %v1441 = vmul.f32 %v1301, %v1431
        %v1442 = vmul.f32 %v1302, %v1431
        %v1443 = vmul.f32 %v1303, %v1431
        %v1444 = vmul.f32 %v1304, %v1431
        %v1445 = vmul.f32 %v1305, %v1431
        %v1446 = vmul.f32 %v1306, %v1431
        %v1447 = vmul.f32 %v1307, %v1431
        %v1448 = vmul.f32 %v1308, %v1431
        %v1449 = vmul.f32 %v1309, %v1431
        %v1450 = vmul.f32 %v1310, %v1431
        %v1451 = vmul.f32 %v1311, %v1431
        %v1452 = vmul.f32 %v1312, %v1431
        %v1453 = vmul.f32 %v1313, %v1431
        %v1454 = vmul.f32 %v1314, %v1431
        %v1455 = vmul.f32 %v1315, %v1431
        %v1456 = vmul.f32 %v1316, %v1431
        %v1457 = vmul.f32 %v1317, %v1431
        %v1458 = vmul.f32 %v1318, %v1431
        %v1459 = vmul.f32 %v1319, %v1431
        %v1460 = vmul.f32 %v1356, %v1431
        %v1461 = vmul.f32 %v1357, %v1431
        %v1462 = vmul.f32 %v1426, %v1431
        %v1463 = vmul.f32 %v1427, %v1431
        %v1464 = vadd.f32 %v1394, %v1432
        %v1465 = vadd.f32 %v1395, %v1433
        %v1466 = vadd.f32 %v1396, %v1434
        %v1467 = vadd.f32 %v1397, %v1435
        %v1468 = vadd.f32 %v1398, %v1436
        %v1469 = vadd.f32 %v1399, %v1437
        %v1470 = vadd.f32 %v1400, %v1438
        %v1471 = vadd.f32 %v1401, %v1439
        %v1472 = vadd.f32 %v1402, %v1440
        %v1473 = vadd.f32 %v1403, %v1441
        %v1474 = vadd.f32 %v1404, %v1442
        %v1475 = vadd.f32 %v1405, %v1443
        %v1476 = vadd.f32 %v1406, %v1444
        %v1477 = vadd.f32 %v1407, %v1445
        %v1478 = vadd.f32 %v1408, %v1446
        %v1479 = vadd.f32 %v1409, %v1447
        %v1480 = vadd.f32 %v1410, %v1448
        %v1481 = vadd.f32 %v1411, %v1449
        %v1482 = vadd.f32 %v1412, %v1450
        %v1483 = vadd.f32 %v1413, %v1451
        %v1484 = vadd.f32 %v1414, %v1452
        %v1485 = vadd.f32 %v1415, %v1453
        %v1486 = vadd.f32 %v1416, %v1454
        %v1487 = vadd.f32 %v1417, %v1455
        %v1488 = vadd.f32 %v1418, %v1456
        %v1489 = vadd.f32 %v1419, %v1457
        %v1490 = vadd.f32 %v1420, %v1458
        %v1491 = vadd.f32 %v1421, %v1459
        %v1492 = vadd.f32 %v1422, %v1460
        %v1493 = vadd.f32 %v1423, %v1461
        %v1494 = vadd.f32 %v1424, %v1462
        %v1495 = vadd.f32 %v1425, %v1463
        %v1496 = vld [vmem:[#allocation2 + $0x9] sm:$0xff]
        %v1497 = vld [vmem:[#allocation2 + $0x11] sm:$0xff]
        %v1498 = vld [vmem:[#allocation2 + $0x19] sm:$0xff]
        %v1499 = vld [vmem:[#allocation2 + $0x21] sm:$0xff]
        %v1500 = vld [vmem:[#allocation2 + $0x29] sm:$0xff]
        %v1501 = vld [vmem:[#allocation2 + $0x31] sm:$0xff]
        %v1502 = vld [vmem:[#allocation2 + $0x39] sm:$0xff]
        %v1503 = vld [vmem:[#allocation2 + $0x41] sm:$0xff]
        %v1504 = vld [vmem:[#allocation2 + $0x49] sm:$0xff]
        %v1505 = vld [vmem:[#allocation2 + $0x51] sm:$0xff]
        %v1506 = vld [vmem:[#allocation2 + $0x59] sm:$0xff]
        %v1507 = vld [vmem:[#allocation2 + $0x61] sm:$0xff]
        %v1508 = vld [vmem:[#allocation2 + $0x69] sm:$0xff]
        %v1509 = vld [vmem:[#allocation2 + $0x71] sm:$0xff]
        %v1510 = vld [vmem:[#allocation2 + $0x79] sm:$0xff]
        %v1511 = vld [vmem:[#allocation2 + $0x81] sm:$0xff]
        %v1512 = vld [vmem:[#allocation2 + $0x89] sm:$0xff]
        %v1513 = vld [vmem:[#allocation2 + $0x91] sm:$0xff]
        %v1514 = vld [vmem:[#allocation2 + $0x99] sm:$0xff]
        %v1515 = vld [vmem:[#allocation2 + $0xa1] sm:$0xff]
        %v1516 = vld [vmem:[#allocation2 + $0xa9] sm:$0xff]
        %v1517 = vld [vmem:[#allocation2 + $0xb1] sm:$0xff]
        %v1518 = vld [vmem:[#allocation2 + $0xb9] sm:$0xff]
        %v1519 = vld [vmem:[#allocation2 + $0xc1] sm:$0xff]
        %v1520 = vld [vmem:[#allocation2 + $0xc9] sm:$0xff]
        %v1521 = vld [vmem:[#allocation2 + $0xd1] sm:$0xff]
        %v1522 = vld [vmem:[#allocation2 + $0xd9] sm:$0xff]
        %v1523 = vld [vmem:[#allocation2 + $0xe1] sm:$0xff]
        %v1524 = vld [vmem:[#allocation2 + $0xe9] sm:$0xff]
        %v1525 = vld [vmem:[#allocation2 + $0xf1] sm:$0xff]
        %v1526 = vld [vmem:[#allocation2 + $0xf9] sm:$0xff]
        %v1527 = vld [vmem:[#allocation2 + $0x101] sm:$0xff]
        %v1528 = vlaneseq
        %v1529 = vshrl.u32 %v1528, 7
        %v1530 = vsub.s32 2, %v1529
        %v1531 = vrot.slane %v1078, %v1530
        %v1532 = vmul.f32 %v1496, %v1531
        %v1533 = vmul.f32 %v1497, %v1531
        %v1534 = vmul.f32 %v1498, %v1531
        %v1535 = vmul.f32 %v1499, %v1531
        %v1536 = vmul.f32 %v1500, %v1531
        %v1537 = vmul.f32 %v1501, %v1531
        %v1538 = vmul.f32 %v1502, %v1531
        %v1539 = vmul.f32 %v1503, %v1531
        %v1540 = vmul.f32 %v1504, %v1531
        %v1541 = vmul.f32 %v1505, %v1531
        %v1542 = vmul.f32 %v1506, %v1531
        %v1543 = vmul.f32 %v1507, %v1531
        %v1544 = vmul.f32 %v1508, %v1531
        %v1545 = vmul.f32 %v1509, %v1531
        %v1546 = vmul.f32 %v1510, %v1531
        %v1547 = vmul.f32 %v1511, %v1531
        %v1548 = vmul.f32 %v1512, %v1531
        %v1549 = vmul.f32 %v1513, %v1531
        %v1550 = vmul.f32 %v1514, %v1531
        %v1551 = vmul.f32 %v1515, %v1531
        %v1552 = vmul.f32 %v1516, %v1531
        %v1553 = vmul.f32 %v1517, %v1531
        %v1554 = vmul.f32 %v1518, %v1531
        %v1555 = vmul.f32 %v1519, %v1531
        %v1556 = vmul.f32 %v1520, %v1531
        %v1557 = vmul.f32 %v1521, %v1531
        %v1558 = vmul.f32 %v1522, %v1531
        %v1559 = vmul.f32 %v1523, %v1531
        %v1560 = vmul.f32 %v1524, %v1531
        %v1561 = vmul.f32 %v1525, %v1531
        %v1562 = vmul.f32 %v1526, %v1531
        %v1563 = vmul.f32 %v1527, %v1531
        %v1564 = vld [vmem:[#allocation2 + $0x109] sm:$0xff]
        %v1565 = vld [vmem:[#allocation2 + $0x111] sm:$0xff]
        %v1566 = vlaneseq
        %v1567 = vshrl.u32 %v1566, 7
        %v1568 = vsub.s32 5, %v1567
        %v1569 = vrot.slane %v1078, %v1568
        %v1570 = vmul.f32 %v1498, %v1569
        %v1571 = vmul.f32 %v1499, %v1569
        %v1572 = vmul.f32 %v1500, %v1569
        %v1573 = vmul.f32 %v1501, %v1569
        %v1574 = vmul.f32 %v1502, %v1569
        %v1575 = vmul.f32 %v1503, %v1569
        %v1576 = vmul.f32 %v1504, %v1569
        %v1577 = vmul.f32 %v1505, %v1569
        %v1578 = vmul.f32 %v1506, %v1569
        %v1579 = vmul.f32 %v1507, %v1569
        %v1580 = vmul.f32 %v1508, %v1569
        %v1581 = vmul.f32 %v1509, %v1569
        %v1582 = vmul.f32 %v1510, %v1569
        %v1583 = vmul.f32 %v1511, %v1569
        %v1584 = vmul.f32 %v1512, %v1569
        %v1585 = vmul.f32 %v1513, %v1569
        %v1586 = vmul.f32 %v1514, %v1569
        %v1587 = vmul.f32 %v1515, %v1569
        %v1588 = vmul.f32 %v1516, %v1569
        %v1589 = vmul.f32 %v1517, %v1569
        %v1590 = vmul.f32 %v1518, %v1569
        %v1591 = vmul.f32 %v1519, %v1569
        %v1592 = vmul.f32 %v1520, %v1569
        %v1593 = vmul.f32 %v1521, %v1569
        %v1594 = vmul.f32 %v1522, %v1569
        %v1595 = vmul.f32 %v1523, %v1569
        %v1596 = vmul.f32 %v1524, %v1569
        %v1597 = vmul.f32 %v1525, %v1569
        %v1598 = vmul.f32 %v1526, %v1569
        %v1599 = vmul.f32 %v1527, %v1569
        %v1600 = vmul.f32 %v1564, %v1569
        %v1601 = vmul.f32 %v1565, %v1569
        %v1602 = vadd.f32 %v1532, %v1570
        %v1603 = vadd.f32 %v1533, %v1571
        %v1604 = vadd.f32 %v1534, %v1572
        %v1605 = vadd.f32 %v1535, %v1573
        %v1606 = vadd.f32 %v1536, %v1574
        %v1607 = vadd.f32 %v1537, %v1575
        %v1608 = vadd.f32 %v1538, %v1576
        %v1609 = vadd.f32 %v1539, %v1577
        %v1610 = vadd.f32 %v1540, %v1578
        %v1611 = vadd.f32 %v1541, %v1579
        %v1612 = vadd.f32 %v1542, %v1580
        %v1613 = vadd.f32 %v1543, %v1581
        %v1614 = vadd.f32 %v1544, %v1582
        %v1615 = vadd.f32 %v1545, %v1583
        %v1616 = vadd.f32 %v1546, %v1584
        %v1617 = vadd.f32 %v1547, %v1585
        %v1618 = vadd.f32 %v1548, %v1586
        %v1619 = vadd.f32 %v1549, %v1587
        %v1620 = vadd.f32 %v1550, %v1588
        %v1621 = vadd.f32 %v1551, %v1589
        %v1622 = vadd.f32 %v1552, %v1590
        %v1623 = vadd.f32 %v1553, %v1591
        %v1624 = vadd.f32 %v1554, %v1592
        %v1625 = vadd.f32 %v1555, %v1593
        %v1626 = vadd.f32 %v1556, %v1594
        %v1627 = vadd.f32 %v1557, %v1595
        %v1628 = vadd.f32 %v1558, %v1596
        %v1629 = vadd.f32 %v1559, %v1597
        %v1630 = vadd.f32 %v1560, %v1598
        %v1631 = vadd.f32 %v1561, %v1599
        %v1632 = vadd.f32 %v1562, %v1600
        %v1633 = vadd.f32 %v1563, %v1601
        %v1634 = vld [vmem:[#allocation2 + $0x119] sm:$0xff]
        %v1635 = vld [vmem:[#allocation2 + $0x121] sm:$0xff]
        %v1636 = vlaneseq
        %v1637 = vshrl.u32 %v1636, 7
        %v1638 = vsub.s32 0, %v1637
        %v1639 = vrot.slane %v1079, %v1638
        %v1640 = vmul.f32 %v1500, %v1639
        %v1641 = vmul.f32 %v1501, %v1639
        %v1642 = vmul.f32 %v1502, %v1639
        %v1643 = vmul.f32 %v1503, %v1639
        %v1644 = vmul.f32 %v1504, %v1639
        %v1645 = vmul.f32 %v1505, %v1639
        %v1646 = vmul.f32 %v1506, %v1639
        %v1647 = vmul.f32 %v1507, %v1639
        %v1648 = vmul.f32 %v1508, %v1639
        %v1649 = vmul.f32 %v1509, %v1639
        %v1650 = vmul.f32 %v1510, %v1639
        %v1651 = vmul.f32 %v1511, %v1639
        %v1652 = vmul.f32 %v1512, %v1639
        %v1653 = vmul.f32 %v1513, %v1639
        %v1654 = vmul.f32 %v1514, %v1639
        %v1655 = vmul.f32 %v1515, %v1639
        %v1656 = vmul.f32 %v1516, %v1639
        %v1657 = vmul.f32 %v1517, %v1639
        %v1658 = vmul.f32 %v1518, %v1639
        %v1659 = vmul.f32 %v1519, %v1639
        %v1660 = vmul.f32 %v1520, %v1639
        %v1661 = vmul.f32 %v1521, %v1639
        %v1662 = vmul.f32 %v1522, %v1639
        %v1663 = vmul.f32 %v1523, %v1639
        %v1664 = vmul.f32 %v1524, %v1639
        %v1665 = vmul.f32 %v1525, %v1639
        %v1666 = vmul.f32 %v1526, %v1639
        %v1667 = vmul.f32 %v1527, %v1639
        %v1668 = vmul.f32 %v1564, %v1639
        %v1669 = vmul.f32 %v1565, %v1639
        %v1670 = vmul.f32 %v1634, %v1639
        %v1671 = vmul.f32 %v1635, %v1639
        %v1672 = vadd.f32 %v1602, %v1640
        %v1673 = vadd.f32 %v1603, %v1641
        %v1674 = vadd.f32 %v1604, %v1642
        %v1675 = vadd.f32 %v1605, %v1643
        %v1676 = vadd.f32 %v1606, %v1644
        %v1677 = vadd.f32 %v1607, %v1645
        %v1678 = vadd.f32 %v1608, %v1646
        %v1679 = vadd.f32 %v1609, %v1647
        %v1680 = vadd.f32 %v1610, %v1648
        %v1681 = vadd.f32 %v1611, %v1649
        %v1682 = vadd.f32 %v1612, %v1650
        %v1683 = vadd.f32 %v1613, %v1651
        %v1684 = vadd.f32 %v1614, %v1652
        %v1685 = vadd.f32 %v1615, %v1653
        %v1686 = vadd.f32 %v1616, %v1654
        %v1687 = vadd.f32 %v1617, %v1655
        %v1688 = vadd.f32 %v1618, %v1656
        %v1689 = vadd.f32 %v1619, %v1657
        %v1690 = vadd.f32 %v1620, %v1658
        %v1691 = vadd.f32 %v1621, %v1659
        %v1692 = vadd.f32 %v1622, %v1660
        %v1693 = vadd.f32 %v1623, %v1661
        %v1694 = vadd.f32 %v1624, %v1662
        %v1695 = vadd.f32 %v1625, %v1663
        %v1696 = vadd.f32 %v1626, %v1664
        %v1697 = vadd.f32 %v1627, %v1665
        %v1698 = vadd.f32 %v1628, %v1666
        %v1699 = vadd.f32 %v1629, %v1667
        %v1700 = vadd.f32 %v1630, %v1668
        %v1701 = vadd.f32 %v1631, %v1669
        %v1702 = vadd.f32 %v1632, %v1670
        %v1703 = vadd.f32 %v1633, %v1671
        %v1704 = vld [vmem:[%s4] sm:$0x1]
        %v1706 = vlaneseq
        %v1707 = vshrl.u32 %v1706, 7
        %v1708 = vsub.s32 0, %v1707
        %v1709 = vrot.slane %v1704, %v1708
        %v1711 = vadd.f32 %v1709, %v1256
        %v1712 = vadd.f32 %v1709, %v1257
        %v1713 = vadd.f32 %v1709, %v1258
        %v1714 = vadd.f32 %v1709, %v1259
        %v1715 = vadd.f32 %v1709, %v1260
        %v1716 = vadd.f32 %v1709, %v1261
        %v1717 = vadd.f32 %v1709, %v1262
        %v1718 = vadd.f32 %v1709, %v1263
        %v1719 = vadd.f32 %v1709, %v1264
        %v1720 = vadd.f32 %v1709, %v1265
        %v1721 = vadd.f32 %v1709, %v1266
        %v1722 = vadd.f32 %v1709, %v1267
        %v1723 = vadd.f32 %v1709, %v1268
        %v1724 = vadd.f32 %v1709, %v1269
        %v1725 = vadd.f32 %v1709, %v1270
        %v1726 = vadd.f32 %v1709, %v1271
        %v1727 = vadd.f32 %v1709, %v1272
        %v1728 = vadd.f32 %v1709, %v1273
        %v1729 = vadd.f32 %v1709, %v1274
        %v1730 = vadd.f32 %v1709, %v1275
        %v1731 = vadd.f32 %v1709, %v1276
        %v1732 = vadd.f32 %v1709, %v1277
        %v1733 = vadd.f32 %v1709, %v1278
        %v1734 = vadd.f32 %v1709, %v1279
        %v1735 = vadd.f32 %v1709, %v1280
        %v1736 = vadd.f32 %v1709, %v1281
        %v1737 = vadd.f32 %v1709, %v1282
        %v1738 = vadd.f32 %v1709, %v1283
        %v1739 = vadd.f32 %v1709, %v1284
        %v1740 = vadd.f32 %v1709, %v1285
        %v1741 = vadd.f32 %v1709, %v1286
        %v1742 = vadd.f32 %v1709, %v1287
        %v1743 = vsel %vm1014, 1, 0
        %v1744 = vsel %vm1015, 1, 0
        %v1745 = vsel %vm1016, 1, 0
        %v1746 = vsel %vm1017, 1, 0
        %v1747 = vsel %vm1018, 1, 0
        %v1748 = vsel %vm1019, 1, 0
        %v1749 = vsel %vm1020, 1, 0
        %v1750 = vsel %vm1021, 1, 0
        %v1751 = vsel %vm1022, 1, 0
        %v1752 = vsel %vm1023, 1, 0
        %v1753 = vsel %vm1024, 1, 0
        %v1754 = vsel %vm1025, 1, 0
        %v1755 = vsel %vm1026, 1, 0
        %v1756 = vsel %vm1027, 1, 0
        %v1757 = vsel %vm1028, 1, 0
        %v1758 = vsel %vm1029, 1, 0
        %v1759 = vsel %vm1030, 1, 0
        %v1760 = vsel %vm1031, 1, 0
        %v1761 = vsel %vm1032, 1, 0
        %v1762 = vsel %vm1033, 1, 0
        %v1763 = vsel %vm1034, 1, 0
        %v1764 = vsel %vm1035, 1, 0
        %v1765 = vsel %vm1036, 1, 0
        %v1766 = vsel %vm1037, 1, 0
        %v1767 = vsel %vm1038, 1, 0
        %v1768 = vsel %vm1039, 1, 0
        %v1769 = vsel %vm1040, 1, 0
        %v1770 = vsel %vm1041, 1, 0
        %v1771 = vsel %vm1042, 1, 0
        %v1772 = vsel %vm1043, 1, 0
        %v1773 = vsel %vm1044, 1, 0
        %v1774 = vsel %vm1045, 1, 0
        %vm1775 = vcmp.eq.s32.totalorder %v1743, 1
        %vm1776 = vcmp.eq.s32.totalorder %v1744, 1
        %vm1777 = vcmp.eq.s32.totalorder %v1745, 1
        %vm1778 = vcmp.eq.s32.totalorder %v1746, 1
        %vm1779 = vcmp.eq.s32.totalorder %v1747, 1
        %vm1780 = vcmp.eq.s32.totalorder %v1748, 1
        %vm1781 = vcmp.eq.s32.totalorder %v1749, 1
        %vm1782 = vcmp.eq.s32.totalorder %v1750, 1
        %vm1783 = vcmp.eq.s32.totalorder %v1751, 1
        %vm1784 = vcmp.eq.s32.totalorder %v1752, 1
        %vm1785 = vcmp.eq.s32.totalorder %v1753, 1
        %vm1786 = vcmp.eq.s32.totalorder %v1754, 1
        %vm1787 = vcmp.eq.s32.totalorder %v1755, 1
        %vm1788 = vcmp.eq.s32.totalorder %v1756, 1
        %vm1789 = vcmp.eq.s32.totalorder %v1757, 1
        %vm1790 = vcmp.eq.s32.totalorder %v1758, 1
        %vm1791 = vcmp.eq.s32.totalorder %v1759, 1
        %vm1792 = vcmp.eq.s32.totalorder %v1760, 1
        %vm1793 = vcmp.eq.s32.totalorder %v1761, 1
        %vm1794 = vcmp.eq.s32.totalorder %v1762, 1
        %vm1795 = vcmp.eq.s32.totalorder %v1763, 1
        %vm1796 = vcmp.eq.s32.totalorder %v1764, 1
        %vm1797 = vcmp.eq.s32.totalorder %v1765, 1
        %vm1798 = vcmp.eq.s32.totalorder %v1766, 1
        %vm1799 = vcmp.eq.s32.totalorder %v1767, 1
        %vm1800 = vcmp.eq.s32.totalorder %v1768, 1
        %vm1801 = vcmp.eq.s32.totalorder %v1769, 1
        %vm1802 = vcmp.eq.s32.totalorder %v1770, 1
        %vm1803 = vcmp.eq.s32.totalorder %v1771, 1
        %vm1804 = vcmp.eq.s32.totalorder %v1772, 1
        %vm1805 = vcmp.eq.s32.totalorder %v1773, 1
        %vm1806 = vcmp.eq.s32.totalorder %v1774, 1
        %v1807 = vsel %vm1775, %v1464, 0.0
        %v1808 = vsel %vm1776, %v1465, 0.0
        %v1809 = vsel %vm1777, %v1466, 0.0
        %v1810 = vsel %vm1778, %v1467, 0.0
        %v1811 = vsel %vm1779, %v1468, 0.0
        %v1812 = vsel %vm1780, %v1469, 0.0
        %v1813 = vsel %vm1781, %v1470, 0.0
        %v1814 = vsel %vm1782, %v1471, 0.0
        %v1815 = vsel %vm1783, %v1472, 0.0
        %v1816 = vsel %vm1784, %v1473, 0.0
        %v1817 = vsel %vm1785, %v1474, 0.0
        %v1818 = vsel %vm1786, %v1475, 0.0
        %v1819 = vsel %vm1787, %v1476, 0.0
        %v1820 = vsel %vm1788, %v1477, 0.0
        %v1821 = vsel %vm1789, %v1478, 0.0
        %v1822 = vsel %vm1790, %v1479, 0.0
        %v1823 = vsel %vm1791, %v1480, 0.0
        %v1824 = vsel %vm1792, %v1481, 0.0
        %v1825 = vsel %vm1793, %v1482, 0.0
        %v1826 = vsel %vm1794, %v1483, 0.0
        %v1827 = vsel %vm1795, %v1484, 0.0
        %v1828 = vsel %vm1796, %v1485, 0.0
        %v1829 = vsel %vm1797, %v1486, 0.0
        %v1830 = vsel %vm1798, %v1487, 0.0
        %v1831 = vsel %vm1799, %v1488, 0.0
        %v1832 = vsel %vm1800, %v1489, 0.0
        %v1833 = vsel %vm1801, %v1490, 0.0
        %v1834 = vsel %vm1802, %v1491, 0.0
        %v1835 = vsel %vm1803, %v1492, 0.0
        %v1836 = vsel %vm1804, %v1493, 0.0
        %v1837 = vsel %vm1805, %v1494, 0.0
        %v1838 = vsel %vm1806, %v1495, 0.0
        %v1839 = vadd.f32 %v1711, %v1807
        %v1840 = vadd.f32 %v1712, %v1808
        %v1841 = vadd.f32 %v1713, %v1809
        %v1842 = vadd.f32 %v1714, %v1810
        %v1843 = vadd.f32 %v1715, %v1811
        %v1844 = vadd.f32 %v1716, %v1812
        %v1845 = vadd.f32 %v1717, %v1813
        %v1846 = vadd.f32 %v1718, %v1814
        %v1847 = vadd.f32 %v1719, %v1815
        %v1848 = vadd.f32 %v1720, %v1816
        %v1849 = vadd.f32 %v1721, %v1817
        %v1850 = vadd.f32 %v1722, %v1818
        %v1851 = vadd.f32 %v1723, %v1819
        %v1852 = vadd.f32 %v1724, %v1820
        %v1853 = vadd.f32 %v1725, %v1821
        %v1854 = vadd.f32 %v1726, %v1822
        %v1855 = vadd.f32 %v1727, %v1823
        %v1856 = vadd.f32 %v1728, %v1824
        %v1857 = vadd.f32 %v1729, %v1825
        %v1858 = vadd.f32 %v1730, %v1826
        %v1859 = vadd.f32 %v1731, %v1827
        %v1860 = vadd.f32 %v1732, %v1828
        %v1861 = vadd.f32 %v1733, %v1829
        %v1862 = vadd.f32 %v1734, %v1830
        %v1863 = vadd.f32 %v1735, %v1831
        %v1864 = vadd.f32 %v1736, %v1832
        %v1865 = vadd.f32 %v1737, %v1833
        %v1866 = vadd.f32 %v1738, %v1834
        %v1867 = vadd.f32 %v1739, %v1835
        %v1868 = vadd.f32 %v1740, %v1836
        %v1869 = vadd.f32 %v1741, %v1837
        %v1870 = vadd.f32 %v1742, %v1838
        %v1871 = vsel %vm1046, 1, 0
        %v1872 = vsel %vm1047, 1, 0
        %v1873 = vsel %vm1048, 1, 0
        %v1874 = vsel %vm1049, 1, 0
        %v1875 = vsel %vm1050, 1, 0
        %v1876 = vsel %vm1051, 1, 0
        %v1877 = vsel %vm1052, 1, 0
        %v1878 = vsel %vm1053, 1, 0
        %v1879 = vsel %vm1054, 1, 0
        %v1880 = vsel %vm1055, 1, 0
        %v1881 = vsel %vm1056, 1, 0
        %v1882 = vsel %vm1057, 1, 0
        %v1883 = vsel %vm1058, 1, 0
        %v1884 = vsel %vm1059, 1, 0
        %v1885 = vsel %vm1060, 1, 0
        %v1886 = vsel %vm1061, 1, 0
        %v1887 = vsel %vm1062, 1, 0
        %v1888 = vsel %vm1063, 1, 0
        %v1889 = vsel %vm1064, 1, 0
        %v1890 = vsel %vm1065, 1, 0
        %v1891 = vsel %vm1066, 1, 0
        %v1892 = vsel %vm1067, 1, 0
        %v1893 = vsel %vm1068, 1, 0
        %v1894 = vsel %vm1069, 1, 0
        %v1895 = vsel %vm1070, 1, 0
        %v1896 = vsel %vm1071, 1, 0
        %v1897 = vsel %vm1072, 1, 0
        %v1898 = vsel %vm1073, 1, 0
        %v1899 = vsel %vm1074, 1, 0
        %v1900 = vsel %vm1075, 1, 0
        %v1901 = vsel %vm1076, 1, 0
        %v1902 = vsel %vm1077, 1, 0
        %vm1903 = vcmp.eq.s32.totalorder %v1871, 1
        %vm1904 = vcmp.eq.s32.totalorder %v1872, 1
        %vm1905 = vcmp.eq.s32.totalorder %v1873, 1
        %vm1906 = vcmp.eq.s32.totalorder %v1874, 1
        %vm1907 = vcmp.eq.s32.totalorder %v1875, 1
        %vm1908 = vcmp.eq.s32.totalorder %v1876, 1
        %vm1909 = vcmp.eq.s32.totalorder %v1877, 1
        %vm1910 = vcmp.eq.s32.totalorder %v1878, 1
        %vm1911 = vcmp.eq.s32.totalorder %v1879, 1
        %vm1912 = vcmp.eq.s32.totalorder %v1880, 1
        %vm1913 = vcmp.eq.s32.totalorder %v1881, 1
        %vm1914 = vcmp.eq.s32.totalorder %v1882, 1
        %vm1915 = vcmp.eq.s32.totalorder %v1883, 1
        %vm1916 = vcmp.eq.s32.totalorder %v1884, 1
        %vm1917 = vcmp.eq.s32.totalorder %v1885, 1
        %vm1918 = vcmp.eq.s32.totalorder %v1886, 1
        %vm1919 = vcmp.eq.s32.totalorder %v1887, 1
        %vm1920 = vcmp.eq.s32.totalorder %v1888, 1
        %vm1921 = vcmp.eq.s32.totalorder %v1889, 1
        %vm1922 = vcmp.eq.s32.totalorder %v1890, 1
        %vm1923 = vcmp.eq.s32.totalorder %v1891, 1
        %vm1924 = vcmp.eq.s32.totalorder %v1892, 1
        %vm1925 = vcmp.eq.s32.totalorder %v1893, 1
        %vm1926 = vcmp.eq.s32.totalorder %v1894, 1
        %vm1927 = vcmp.eq.s32.totalorder %v1895, 1
        %vm1928 = vcmp.eq.s32.totalorder %v1896, 1
        %vm1929 = vcmp.eq.s32.totalorder %v1897, 1
        %vm1930 = vcmp.eq.s32.totalorder %v1898, 1
        %vm1931 = vcmp.eq.s32.totalorder %v1899, 1
        %vm1932 = vcmp.eq.s32.totalorder %v1900, 1
        %vm1933 = vcmp.eq.s32.totalorder %v1901, 1
        %vm1934 = vcmp.eq.s32.totalorder %v1902, 1
        %v1935 = vsel %vm1903, %v1672, 0.0
        %v1936 = vsel %vm1904, %v1673, 0.0
        %v1937 = vsel %vm1905, %v1674, 0.0
        %v1938 = vsel %vm1906, %v1675, 0.0
        %v1939 = vsel %vm1907, %v1676, 0.0
        %v1940 = vsel %vm1908, %v1677, 0.0
        %v1941 = vsel %vm1909, %v1678, 0.0
        %v1942 = vsel %vm1910, %v1679, 0.0
        %v1943 = vsel %vm1911, %v1680, 0.0
        %v1944 = vsel %vm1912, %v1681, 0.0
        %v1945 = vsel %vm1913, %v1682, 0.0
        %v1946 = vsel %vm1914, %v1683, 0.0
        %v1947 = vsel %vm1915, %v1684, 0.0
        %v1948 = vsel %vm1916, %v1685, 0.0
        %v1949 = vsel %vm1917, %v1686, 0.0
        %v1950 = vsel %vm1918, %v1687, 0.0
        %v1951 = vsel %vm1919, %v1688, 0.0
        %v1952 = vsel %vm1920, %v1689, 0.0
        %v1953 = vsel %vm1921, %v1690, 0.0
        %v1954 = vsel %vm1922, %v1691, 0.0
        %v1955 = vsel %vm1923, %v1692, 0.0
        %v1956 = vsel %vm1924, %v1693, 0.0
        %v1957 = vsel %vm1925, %v1694, 0.0
        %v1958 = vsel %vm1926, %v1695, 0.0
        %v1959 = vsel %vm1927, %v1696, 0.0
        %v1960 = vsel %vm1928, %v1697, 0.0
        %v1961 = vsel %vm1929, %v1698, 0.0
        %v1962 = vsel %vm1930, %v1699, 0.0
        %v1963 = vsel %vm1931, %v1700, 0.0
        %v1964 = vsel %vm1932, %v1701, 0.0
        %v1965 = vsel %vm1933, %v1702, 0.0
        %v1966 = vsel %vm1934, %v1703, 0.0
        %v1967 = vadd.f32 %v1839, %v1935
        %v1968 = vadd.f32 %v1840, %v1936
        %v1969 = vadd.f32 %v1841, %v1937
        %v1970 = vadd.f32 %v1842, %v1938
        %v1971 = vadd.f32 %v1843, %v1939
        %v1972 = vadd.f32 %v1844, %v1940
        %v1973 = vadd.f32 %v1845, %v1941
        %v1974 = vadd.f32 %v1846, %v1942
        %v1975 = vadd.f32 %v1847, %v1943
        %v1976 = vadd.f32 %v1848, %v1944
        %v1977 = vadd.f32 %v1849, %v1945
        %v1978 = vadd.f32 %v1850, %v1946
        %v1979 = vadd.f32 %v1851, %v1947
        %v1980 = vadd.f32 %v1852, %v1948
        %v1981 = vadd.f32 %v1853, %v1949
        %v1982 = vadd.f32 %v1854, %v1950
        %v1983 = vadd.f32 %v1855, %v1951
        %v1984 = vadd.f32 %v1856, %v1952
        %v1985 = vadd.f32 %v1857, %v1953
        %v1986 = vadd.f32 %v1858, %v1954
        %v1987 = vadd.f32 %v1859, %v1955
        %v1988 = vadd.f32 %v1860, %v1956
        %v1989 = vadd.f32 %v1861, %v1957
        %v1990 = vadd.f32 %v1862, %v1958
        %v1991 = vadd.f32 %v1863, %v1959
        %v1992 = vadd.f32 %v1864, %v1960
        %v1993 = vadd.f32 %v1865, %v1961
        %v1994 = vadd.f32 %v1866, %v1962
        %v1995 = vadd.f32 %v1867, %v1963
        %v1996 = vadd.f32 %v1868, %v1964
        %v1997 = vadd.f32 %v1869, %v1965
        %v1998 = vadd.f32 %v1870, %v1966
        %v1999 = vmul.f32 %v1967, 0.5
        %v2000 = vmul.f32 %v1968, 0.5
        %v2001 = vmul.f32 %v1969, 0.5
        %v2002 = vmul.f32 %v1970, 0.5
        %v2003 = vmul.f32 %v1971, 0.5
        %v2004 = vmul.f32 %v1972, 0.5
        %v2005 = vmul.f32 %v1973, 0.5
        %v2006 = vmul.f32 %v1974, 0.5
        %v2007 = vmul.f32 %v1975, 0.5
        %v2008 = vmul.f32 %v1976, 0.5
        %v2009 = vmul.f32 %v1977, 0.5
        %v2010 = vmul.f32 %v1978, 0.5
        %v2011 = vmul.f32 %v1979, 0.5
        %v2012 = vmul.f32 %v1980, 0.5
        %v2013 = vmul.f32 %v1981, 0.5
        %v2014 = vmul.f32 %v1982, 0.5
        %v2015 = vmul.f32 %v1983, 0.5
        %v2016 = vmul.f32 %v1984, 0.5
        %v2017 = vmul.f32 %v1985, 0.5
        %v2018 = vmul.f32 %v1986, 0.5
        %v2019 = vmul.f32 %v1987, 0.5
        %v2020 = vmul.f32 %v1988, 0.5
        %v2021 = vmul.f32 %v1989, 0.5
        %v2022 = vmul.f32 %v1990, 0.5
        %v2023 = vmul.f32 %v1991, 0.5
        %v2024 = vmul.f32 %v1992, 0.5
        %v2025 = vmul.f32 %v1993, 0.5
        %v2026 = vmul.f32 %v1994, 0.5
        %v2027 = vmul.f32 %v1995, 0.5
        %v2028 = vmul.f32 %v1996, 0.5
        %v2029 = vmul.f32 %v1997, 0.5
        %v2030 = vmul.f32 %v1998, 0.5
        %v2031 = vmul.f32 %v1967, 0.044715
        %v2032 = vmul.f32 %v1968, 0.044715
        %v2033 = vmul.f32 %v1969, 0.044715
        %v2034 = vmul.f32 %v1970, 0.044715
        %v2035 = vmul.f32 %v1971, 0.044715
        %v2036 = vmul.f32 %v1972, 0.044715
        %v2037 = vmul.f32 %v1973, 0.044715
        %v2038 = vmul.f32 %v1974, 0.044715
        %v2039 = vmul.f32 %v1975, 0.044715
        %v2040 = vmul.f32 %v1976, 0.044715
        %v2041 = vmul.f32 %v1977, 0.044715
        %v2042 = vmul.f32 %v1978, 0.044715
        %v2043 = vmul.f32 %v1979, 0.044715
        %v2044 = vmul.f32 %v1980, 0.044715
        %v2045 = vmul.f32 %v1981, 0.044715
        %v2046 = vmul.f32 %v1982, 0.044715
        %v2047 = vmul.f32 %v1983, 0.044715
        %v2048 = vmul.f32 %v1984, 0.044715
        %v2049 = vmul.f32 %v1985, 0.044715
        %v2050 = vmul.f32 %v1986, 0.044715
        %v2051 = vmul.f32 %v1987, 0.044715
        %v2052 = vmul.f32 %v1988, 0.044715
        %v2053 = vmul.f32 %v1989, 0.044715
        %v2054 = vmul.f32 %v1990, 0.044715
        %v2055 = vmul.f32 %v1991, 0.044715
        %v2056 = vmul.f32 %v1992, 0.044715
        %v2057 = vmul.f32 %v1993, 0.044715
        %v2058 = vmul.f32 %v1994, 0.044715
        %v2059 = vmul.f32 %v1995, 0.044715
        %v2060 = vmul.f32 %v1996, 0.044715
        %v2061 = vmul.f32 %v1997, 0.044715
        %v2062 = vmul.f32 %v1998, 0.044715
        %v2063 = vmul.f32 %v2031, %v1967
        %v2064 = vmul.f32 %v2032, %v1968
        %v2065 = vmul.f32 %v2033, %v1969
        %v2066 = vmul.f32 %v2034, %v1970
        %v2067 = vmul.f32 %v2035, %v1971
        %v2068 = vmul.f32 %v2036, %v1972
        %v2069 = vmul.f32 %v2037, %v1973
        %v2070 = vmul.f32 %v2038, %v1974
        %v2071 = vmul.f32 %v2039, %v1975
        %v2072 = vmul.f32 %v2040, %v1976
        %v2073 = vmul.f32 %v2041, %v1977
        %v2074 = vmul.f32 %v2042, %v1978
        %v2075 = vmul.f32 %v2043, %v1979
        %v2076 = vmul.f32 %v2044, %v1980
        %v2077 = vmul.f32 %v2045, %v1981
        %v2078 = vmul.f32 %v2046, %v1982
        %v2079 = vmul.f32 %v2047, %v1983
        %v2080 = vmul.f32 %v2048, %v1984
        %v2081 = vmul.f32 %v2049, %v1985
        %v2082 = vmul.f32 %v2050, %v1986
        %v2083 = vmul.f32 %v2051, %v1987
        %v2084 = vmul.f32 %v2052, %v1988
        %v2085 = vmul.f32 %v2053, %v1989
        %v2086 = vmul.f32 %v2054, %v1990
        %v2087 = vmul.f32 %v2055, %v1991
        %v2088 = vmul.f32 %v2056, %v1992
        %v2089 = vmul.f32 %v2057, %v1993
        %v2090 = vmul.f32 %v2058, %v1994
        %v2091 = vmul.f32 %v2059, %v1995
        %v2092 = vmul.f32 %v2060, %v1996
        %v2093 = vmul.f32 %v2061, %v1997
        %v2094 = vmul.f32 %v2062, %v1998
        %v2095 = vmul.f32 %v2063, %v1967
        %v2096 = vmul.f32 %v2064, %v1968
        %v2097 = vmul.f32 %v2065, %v1969
        %v2098 = vmul.f32 %v2066, %v1970
        %v2099 = vmul.f32 %v2067, %v1971
        %v2100 = vmul.f32 %v2068, %v1972
        %v2101 = vmul.f32 %v2069, %v1973
        %v2102 = vmul.f32 %v2070, %v1974
        %v2103 = vmul.f32 %v2071, %v1975
        %v2104 = vmul.f32 %v2072, %v1976
        %v2105 = vmul.f32 %v2073, %v1977
        %v2106 = vmul.f32 %v2074, %v1978
        %v2107 = vmul.f32 %v2075, %v1979
        %v2108 = vmul.f32 %v2076, %v1980
        %v2109 = vmul.f32 %v2077, %v1981
        %v2110 = vmul.f32 %v2078, %v1982
        %v2111 = vmul.f32 %v2079, %v1983
        %v2112 = vmul.f32 %v2080, %v1984
        %v2113 = vmul.f32 %v2081, %v1985
        %v2114 = vmul.f32 %v2082, %v1986
        %v2115 = vmul.f32 %v2083, %v1987
        %v2116 = vmul.f32 %v2084, %v1988
        %v2117 = vmul.f32 %v2085, %v1989
        %v2118 = vmul.f32 %v2086, %v1990
        %v2119 = vmul.f32 %v2087, %v1991
        %v2120 = vmul.f32 %v2088, %v1992
        %v2121 = vmul.f32 %v2089, %v1993
        %v2122 = vmul.f32 %v2090, %v1994
        %v2123 = vmul.f32 %v2091, %v1995
        %v2124 = vmul.f32 %v2092, %v1996
        %v2125 = vmul.f32 %v2093, %v1997
        %v2126 = vmul.f32 %v2094, %v1998
        %v2127 = vadd.f32 %v1967, %v2095
        %v2128 = vadd.f32 %v1968, %v2096
        %v2129 = vadd.f32 %v1969, %v2097
        %v2130 = vadd.f32 %v1970, %v2098
        %v2131 = vadd.f32 %v1971, %v2099
        %v2132 = vadd.f32 %v1972, %v2100
        %v2133 = vadd.f32 %v1973, %v2101
        %v2134 = vadd.f32 %v1974, %v2102
        %v2135 = vadd.f32 %v1975, %v2103
        %v2136 = vadd.f32 %v1976, %v2104
        %v2137 = vadd.f32 %v1977, %v2105
        %v2138 = vadd.f32 %v1978, %v2106
        %v2139 = vadd.f32 %v1979, %v2107
        %v2140 = vadd.f32 %v1980, %v2108
        %v2141 = vadd.f32 %v1981, %v2109
        %v2142 = vadd.f32 %v1982, %v2110
        %v2143 = vadd.f32 %v1983, %v2111
        %v2144 = vadd.f32 %v1984, %v2112
        %v2145 = vadd.f32 %v1985, %v2113
        %v2146 = vadd.f32 %v1986, %v2114
        %v2147 = vadd.f32 %v1987, %v2115
        %v2148 = vadd.f32 %v1988, %v2116
        %v2149 = vadd.f32 %v1989, %v2117
        %v2150 = vadd.f32 %v1990, %v2118
        %v2151 = vadd.f32 %v1991, %v2119
        %v2152 = vadd.f32 %v1992, %v2120
        %v2153 = vadd.f32 %v1993, %v2121
        %v2154 = vadd.f32 %v1994, %v2122
        %v2155 = vadd.f32 %v1995, %v2123
        %v2156 = vadd.f32 %v1996, %v2124
        %v2157 = vadd.f32 %v1997, %v2125
        %v2158 = vadd.f32 %v1998, %v2126
        %v2159 = vmul.f32 %v2127, 0.7978846
        %v2160 = vmul.f32 %v2128, 0.7978846
        %v2161 = vmul.f32 %v2129, 0.7978846
        %v2162 = vmul.f32 %v2130, 0.7978846
        %v2163 = vmul.f32 %v2131, 0.7978846
        %v2164 = vmul.f32 %v2132, 0.7978846
        %v2165 = vmul.f32 %v2133, 0.7978846
        %v2166 = vmul.f32 %v2134, 0.7978846
        %v2167 = vmul.f32 %v2135, 0.7978846
        %v2168 = vmul.f32 %v2136, 0.7978846
        %v2169 = vmul.f32 %v2137, 0.7978846
        %v2170 = vmul.f32 %v2138, 0.7978846
        %v2171 = vmul.f32 %v2139, 0.7978846
        %v2172 = vmul.f32 %v2140, 0.7978846
        %v2173 = vmul.f32 %v2141, 0.7978846
        %v2174 = vmul.f32 %v2142, 0.7978846
        %v2175 = vmul.f32 %v2143, 0.7978846
        %v2176 = vmul.f32 %v2144, 0.7978846
        %v2177 = vmul.f32 %v2145, 0.7978846
        %v2178 = vmul.f32 %v2146, 0.7978846
        %v2179 = vmul.f32 %v2147, 0.7978846
        %v2180 = vmul.f32 %v2148, 0.7978846
        %v2181 = vmul.f32 %v2149, 0.7978846
        %v2182 = vmul.f32 %v2150, 0.7978846
        %v2183 = vmul.f32 %v2151, 0.7978846
        %v2184 = vmul.f32 %v2152, 0.7978846
        %v2185 = vmul.f32 %v2153, 0.7978846
        %v2186 = vmul.f32 %v2154, 0.7978846
        %v2187 = vmul.f32 %v2155, 0.7978846
        %v2188 = vmul.f32 %v2156, 0.7978846
        %v2189 = vmul.f32 %v2157, 0.7978846
        %v2190 = vmul.f32 %v2158, 0.7978846
        %v2191 = vtanh.pop %v2159
        %v2192 = vtanh.pop %v2160
        %v2193 = vtanh.pop %v2161
        %v2194 = vtanh.pop %v2162
        %v2195 = vtanh.pop %v2163
        %v2196 = vtanh.pop %v2164
        %v2197 = vtanh.pop %v2165
        %v2198 = vtanh.pop %v2166
        %v2199 = vtanh.pop %v2167
        %v2200 = vtanh.pop %v2168
        %v2201 = vtanh.pop %v2169
        %v2202 = vtanh.pop %v2170
        %v2203 = vtanh.pop %v2171
        %v2204 = vtanh.pop %v2172
        %v2205 = vtanh.pop %v2173
        %v2206 = vtanh.pop %v2174
        %v2207 = vtanh.pop %v2175
        %v2208 = vtanh.pop %v2176
        %v2209 = vtanh.pop %v2177
        %v2210 = vtanh.pop %v2178
        %v2211 = vtanh.pop %v2179
        %v2212 = vtanh.pop %v2180
        %v2213 = vtanh.pop %v2181
        %v2214 = vtanh.pop %v2182
        %v2215 = vtanh.pop %v2183
        %v2216 = vtanh.pop %v2184
        %v2217 = vtanh.pop %v2185
        %v2218 = vtanh.pop %v2186
        %v2219 = vtanh.pop %v2187
        %v2220 = vtanh.pop %v2188
        %v2221 = vtanh.pop %v2189
        %v2222 = vtanh.pop %v2190
        %v2223 = vadd.f32 %v2191, 1.0
        %v2224 = vadd.f32 %v2192, 1.0
        %v2225 = vadd.f32 %v2193, 1.0
        %v2226 = vadd.f32 %v2194, 1.0
        %v2227 = vadd.f32 %v2195, 1.0
        %v2228 = vadd.f32 %v2196, 1.0
        %v2229 = vadd.f32 %v2197, 1.0
        %v2230 = vadd.f32 %v2198, 1.0
        %v2231 = vadd.f32 %v2199, 1.0
        %v2232 = vadd.f32 %v2200, 1.0
        %v2233 = vadd.f32 %v2201, 1.0
        %v2234 = vadd.f32 %v2202, 1.0
        %v2235 = vadd.f32 %v2203, 1.0
        %v2236 = vadd.f32 %v2204, 1.0
        %v2237 = vadd.f32 %v2205, 1.0
        %v2238 = vadd.f32 %v2206, 1.0
        %v2239 = vadd.f32 %v2207, 1.0
        %v2240 = vadd.f32 %v2208, 1.0
        %v2241 = vadd.f32 %v2209, 1.0
        %v2242 = vadd.f32 %v2210, 1.0
        %v2243 = vadd.f32 %v2211, 1.0
        %v2244 = vadd.f32 %v2212, 1.0
        %v2245 = vadd.f32 %v2213, 1.0
        %v2246 = vadd.f32 %v2214, 1.0
        %v2247 = vadd.f32 %v2215, 1.0
        %v2248 = vadd.f32 %v2216, 1.0
        %v2249 = vadd.f32 %v2217, 1.0
        %v2250 = vadd.f32 %v2218, 1.0
        %v2251 = vadd.f32 %v2219, 1.0
        %v2252 = vadd.f32 %v2220, 1.0
        %v2253 = vadd.f32 %v2221, 1.0
        %v2254 = vadd.f32 %v2222, 1.0
        %v2255 = vmul.f32 %v1999, %v2223
        %v2256 = vmul.f32 %v2000, %v2224
        %v2257 = vmul.f32 %v2001, %v2225
        %v2258 = vmul.f32 %v2002, %v2226
        %v2259 = vmul.f32 %v2003, %v2227
        %v2260 = vmul.f32 %v2004, %v2228
        %v2261 = vmul.f32 %v2005, %v2229
        %v2262 = vmul.f32 %v2006, %v2230
        %v2263 = vmul.f32 %v2007, %v2231
        %v2264 = vmul.f32 %v2008, %v2232
        %v2265 = vmul.f32 %v2009, %v2233
        %v2266 = vmul.f32 %v2010, %v2234
        %v2267 = vmul.f32 %v2011, %v2235
        %v2268 = vmul.f32 %v2012, %v2236
        %v2269 = vmul.f32 %v2013, %v2237
        %v2270 = vmul.f32 %v2014, %v2238
        %v2271 = vmul.f32 %v2015, %v2239
        %v2272 = vmul.f32 %v2016, %v2240
        %v2273 = vmul.f32 %v2017, %v2241
        %v2274 = vmul.f32 %v2018, %v2242
        %v2275 = vmul.f32 %v2019, %v2243
        %v2276 = vmul.f32 %v2020, %v2244
        %v2277 = vmul.f32 %v2021, %v2245
        %v2278 = vmul.f32 %v2022, %v2246
        %v2279 = vmul.f32 %v2023, %v2247
        %v2280 = vmul.f32 %v2024, %v2248
        %v2281 = vmul.f32 %v2025, %v2249
        %v2282 = vmul.f32 %v2026, %v2250
        %v2283 = vmul.f32 %v2027, %v2251
        %v2284 = vmul.f32 %v2028, %v2252
        %v2285 = vmul.f32 %v2029, %v2253
        %v2286 = vmul.f32 %v2030, %v2254
        %v2287 = vpack.c.bf16 %v2256, %v2255
        %v2288 = vpack.c.bf16 %v2258, %v2257
        %v2289 = vpack.c.bf16 %v2260, %v2259
        %v2290 = vpack.c.bf16 %v2262, %v2261
        %v2291 = vpack.c.bf16 %v2264, %v2263
        %v2292 = vpack.c.bf16 %v2266, %v2265
        %v2293 = vpack.c.bf16 %v2268, %v2267
        %v2294 = vpack.c.bf16 %v2270, %v2269
        %v2295 = vpack.c.bf16 %v2272, %v2271
        %v2296 = vpack.c.bf16 %v2274, %v2273
        %v2297 = vpack.c.bf16 %v2276, %v2275
        %v2298 = vpack.c.bf16 %v2278, %v2277
        %v2299 = vpack.c.bf16 %v2280, %v2279
        %v2300 = vpack.c.bf16 %v2282, %v2281
        %v2301 = vpack.c.bf16 %v2284, %v2283
        %v2302 = vpack.c.bf16 %v2286, %v2285
        %v2303 = vld [vmem:[%s5] sm:$0xf]
        %v2304 = vld [vmem:[%s5 + $0x4] sm:$0xf]
        %v2305 = vld [vmem:[%s5 + $0x8] sm:$0xf]
        %v2306 = vld [vmem:[%s5 + $0xc] sm:$0xf]
        %v2307 = vld [vmem:[%s5 + $0x10] sm:$0xf]
        %v2308 = vld [vmem:[%s5 + $0x14] sm:$0xf]
        %v2309 = vld [vmem:[%s5 + $0x18] sm:$0xf]
        %v2310 = vld [vmem:[%s5 + $0x1c] sm:$0xf]
        %v2311 = vld [vmem:[%s5 + $0x20] sm:$0xf]
        %v2312 = vld [vmem:[%s5 + $0x24] sm:$0xf]
        %v2313 = vld [vmem:[%s5 + $0x28] sm:$0xf]
        %v2314 = vld [vmem:[%s5 + $0x2c] sm:$0xf]
        %v2315 = vld [vmem:[%s5 + $0x30] sm:$0xf]
        %v2316 = vld [vmem:[%s5 + $0x34] sm:$0xf]
        %v2317 = vld [vmem:[%s5 + $0x38] sm:$0xf]
        %v2318 = vld [vmem:[%s5 + $0x3c] sm:$0xf]
        %v2319 = vld [vmem:[%s6] sm:$0x1]
        %v2321 = vlaneseq
        %v2322 = vshrl.u32 %v2321, 7
        %v2323 = vsub.s32 0, %v2322
        %v2324 = vrot.slane %v2319, %v2323
        %v2342 = vunpack.c.l.b16 %v2303
        %v2343 = vunpack.c.l.b16 %v2304
        %v2344 = vunpack.c.l.b16 %v2305
        %v2345 = vunpack.c.l.b16 %v2306
        %v2346 = vunpack.c.l.b16 %v2307
        %v2347 = vunpack.c.l.b16 %v2308
        %v2348 = vunpack.c.l.b16 %v2309
        %v2349 = vunpack.c.l.b16 %v2310
        %v2350 = vunpack.c.l.b16 %v2311
        %v2351 = vunpack.c.l.b16 %v2312
        %v2352 = vunpack.c.l.b16 %v2313
        %v2353 = vunpack.c.l.b16 %v2314
        %v2354 = vunpack.c.l.b16 %v2315
        %v2355 = vunpack.c.l.b16 %v2316
        %v2356 = vunpack.c.l.b16 %v2317
        %v2357 = vunpack.c.l.b16 %v2318
        %v2358 = vpack.c.b16 %v2343, %v2342
        %v2359 = vpack.c.b16 %v2345, %v2344
        %v2360 = vpack.c.b16 %v2347, %v2346
        %v2361 = vpack.c.b16 %v2349, %v2348
        %v2362 = vpack.c.b16 %v2351, %v2350
        %v2363 = vpack.c.b16 %v2353, %v2352
        %v2364 = vpack.c.b16 %v2355, %v2354
        %v2365 = vpack.c.b16 %v2357, %v2356
        %2374 = vmatprep.subr.bf16.mxu0 0
        %2375 = vmatpush1.bf16.msra.mxu0 %v2358
        %2376 = vmatprep.subr.bf16.mxu0 0
        %2377 = vmatpush1.bf16.msra.mxu0 %v2359
        %2378 = vmatprep.subr.bf16.mxu0 0
        %2379 = vmatpush1.bf16.msra.mxu0 %v2360
        %2380 = vmatprep.subr.bf16.mxu0 0
        %2381 = vmatpush1.bf16.msra.mxu0 %v2361
        %2382 = vmatprep.subr.bf16.mxu0 0
        %2383 = vmatpush1.bf16.msra.mxu0 %v2362
        %2384 = vmatprep.subr.bf16.mxu0 0
        %2385 = vmatpush1.bf16.msra.mxu0 %v2363
        %2386 = vmatprep.subr.bf16.mxu0 0
        %2387 = vmatpush1.bf16.msra.mxu0 %v2364
        %2388 = vmatprep.subr.bf16.mxu0 0
        %2389 = vmatpush1.bf16.msra.mxu0 %v2365
        %2390 = vmatprep.subr.bf16.mxu0 0
        %2391 = vmatpush1.bf16.msra.mxu0 0
        %2392 = vmatprep.subr.bf16.mxu0 0
        %2393 = vmatpush1.bf16.msra.mxu0 0
        %2394 = vmatprep.subr.bf16.mxu0 0
        %2395 = vmatpush1.bf16.msra.mxu0 0
        %2396 = vmatprep.subr.bf16.mxu0 0
        %2397 = vmatpush1.bf16.msra.mxu0 0
        %2398 = vmatprep.subr.bf16.mxu0 0
        %2399 = vmatpush1.bf16.msra.mxu0 0
        %2400 = vmatprep.subr.bf16.mxu0 0
        %2401 = vmatpush1.bf16.msra.mxu0 0
        %2402 = vmatprep.subr.bf16.mxu0 0
        %2403 = vmatpush1.bf16.msra.mxu0 0
        %2404 = vmatprep.subr.bf16.mxu0 0
        %2405 = vmatpush1.bf16.msra.mxu0 0
        %2406 = vmatprep.mubr.bf16.mxu0 0
        %2407 = vmatmul.mubr.bf16.gmra.mrb[0].mxu0 %v2287
        %v2408 = vpop.f32.mrb[0].mxu0
        %v2409 = vadd.f32 %v2324, %v2408
        %v2410 = vpop.f32.mrb[0].mxu0
        %v2411 = vpop.f32.mrb[0].mxu0
        %v2412 = vadd.f32 %v2324, %v2411
        %v2413 = vpop.f32.mrb[0].mxu0
        %2414 = vmatprep.mubr.bf16.mxu0 0
        %2415 = vmatmul.mubr.bf16.gmra.mrb[0].mxu0 %v2288
        %v2416 = vpop.f32.mrb[0].mxu0
        %v2417 = vadd.f32 %v2324, %v2416
        %v2418 = vpop.f32.mrb[0].mxu0
        %v2419 = vpop.f32.mrb[0].mxu0
        %v2420 = vadd.f32 %v2324, %v2419
        %v2421 = vpop.f32.mrb[0].mxu0
        %2422 = vmatprep.mubr.bf16.mxu0 0
        %2423 = vmatmul.mubr.bf16.gmra.mrb[0].mxu0 %v2289
        %v2424 = vpop.f32.mrb[0].mxu0
        %v2425 = vadd.f32 %v2324, %v2424
        %v2426 = vpop.f32.mrb[0].mxu0
        %v2427 = vpop.f32.mrb[0].mxu0
        %v2428 = vadd.f32 %v2324, %v2427
        %v2429 = vpop.f32.mrb[0].mxu0
        %2430 = vmatprep.mubr.bf16.mxu0 0
        %2431 = vmatmul.mubr.bf16.gmra.mrb[0].mxu0 %v2290
        %v2432 = vpop.f32.mrb[0].mxu0
        %v2433 = vadd.f32 %v2324, %v2432
        %v2434 = vpop.f32.mrb[0].mxu0
        %v2435 = vpop.f32.mrb[0].mxu0
        %v2436 = vadd.f32 %v2324, %v2435
        %v2437 = vpop.f32.mrb[0].mxu0
        %2438 = vmatprep.mubr.bf16.mxu0 0
        %2439 = vmatmul.mubr.bf16.gmra.mrb[0].mxu0 %v2291
        %v2440 = vpop.f32.mrb[0].mxu0
        %v2441 = vadd.f32 %v2324, %v2440
        %v2442 = vpop.f32.mrb[0].mxu0
        %v2443 = vpop.f32.mrb[0].mxu0
        %v2444 = vadd.f32 %v2324, %v2443
        %v2445 = vpop.f32.mrb[0].mxu0
        %2446 = vmatprep.mubr.bf16.mxu0 0
        %2447 = vmatmul.mubr.bf16.gmra.mrb[0].mxu0 %v2292
        %v2448 = vpop.f32.mrb[0].mxu0
        %v2449 = vadd.f32 %v2324, %v2448
        %v2450 = vpop.f32.mrb[0].mxu0
        %v2451 = vpop.f32.mrb[0].mxu0
        %v2452 = vadd.f32 %v2324, %v2451
        %v2453 = vpop.f32.mrb[0].mxu0
        %2454 = vmatprep.mubr.bf16.mxu0 0
        %2455 = vmatmul.mubr.bf16.gmra.mrb[0].mxu0 %v2293
        %v2456 = vpop.f32.mrb[0].mxu0
        %v2457 = vadd.f32 %v2324, %v2456
        %v2458 = vpop.f32.mrb[0].mxu0
        %v2459 = vpop.f32.mrb[0].mxu0
        %v2460 = vadd.f32 %v2324, %v2459
        %v2461 = vpop.f32.mrb[0].mxu0
        %2462 = vmatprep.mubr.bf16.mxu0 0
        %2463 = vmatmul.mubr.bf16.gmra.mrb[0].mxu0 %v2294
        %v2464 = vpop.f32.mrb[0].mxu0
        %v2465 = vadd.f32 %v2324, %v2464
        %v2466 = vpop.f32.mrb[0].mxu0
        %v2467 = vpop.f32.mrb[0].mxu0
        %v2468 = vadd.f32 %v2324, %v2467
        %v2469 = vpop.f32.mrb[0].mxu0
        %2470 = vmatprep.mubr.bf16.mxu0 0
        %2471 = vmatmul.mubr.bf16.gmra.mrb[0].mxu0 %v2295
        %v2472 = vpop.f32.mrb[0].mxu0
        %v2473 = vadd.f32 %v2324, %v2472
        %v2474 = vpop.f32.mrb[0].mxu0
        %v2475 = vpop.f32.mrb[0].mxu0
        %v2476 = vadd.f32 %v2324, %v2475
        %v2477 = vpop.f32.mrb[0].mxu0
        %2478 = vmatprep.mubr.bf16.mxu0 0
        %2479 = vmatmul.mubr.bf16.gmra.mrb[0].mxu0 %v2296
        %v2480 = vpop.f32.mrb[0].mxu0
        %v2481 = vadd.f32 %v2324, %v2480
        %v2482 = vpop.f32.mrb[0].mxu0
        %v2483 = vpop.f32.mrb[0].mxu0
        %v2484 = vadd.f32 %v2324, %v2483
        %v2485 = vpop.f32.mrb[0].mxu0
        %2486 = vmatprep.mubr.bf16.mxu0 0
        %2487 = vmatmul.mubr.bf16.gmra.mrb[0].mxu0 %v2297
        %v2488 = vpop.f32.mrb[0].mxu0
        %v2489 = vadd.f32 %v2324, %v2488
        %v2490 = vpop.f32.mrb[0].mxu0
        %v2491 = vpop.f32.mrb[0].mxu0
        %v2492 = vadd.f32 %v2324, %v2491
        %v2493 = vpop.f32.mrb[0].mxu0
        %2494 = vmatprep.mubr.bf16.mxu0 0
        %2495 = vmatmul.mubr.bf16.gmra.mrb[0].mxu0 %v2298
        %v2496 = vpop.f32.mrb[0].mxu0
        %v2497 = vadd.f32 %v2324, %v2496
        %v2498 = vpop.f32.mrb[0].mxu0
        %v2499 = vpop.f32.mrb[0].mxu0
        %v2500 = vadd.f32 %v2324, %v2499
        %v2501 = vpop.f32.mrb[0].mxu0
        %2502 = vmatprep.mubr.bf16.mxu0 0
        %2503 = vmatmul.mubr.bf16.gmra.mrb[0].mxu0 %v2299
        %v2504 = vpop.f32.mrb[0].mxu0
        %v2505 = vadd.f32 %v2324, %v2504
        %v2506 = vpop.f32.mrb[0].mxu0
        %v2507 = vpop.f32.mrb[0].mxu0
        %v2508 = vadd.f32 %v2324, %v2507
        %v2509 = vpop.f32.mrb[0].mxu0
        %2510 = vmatprep.mubr.bf16.mxu0 0
        %2511 = vmatmul.mubr.bf16.gmra.mrb[0].mxu0 %v2300
        %v2512 = vpop.f32.mrb[0].mxu0
        %v2513 = vadd.f32 %v2324, %v2512
        %v2514 = vpop.f32.mrb[0].mxu0
        %v2515 = vpop.f32.mrb[0].mxu0
        %v2516 = vadd.f32 %v2324, %v2515
        %v2517 = vpop.f32.mrb[0].mxu0
        %2518 = vmatprep.mubr.bf16.mxu0 0
        %2519 = vmatmul.mubr.bf16.gmra.mrb[0].mxu0 %v2301
        %v2520 = vpop.f32.mrb[0].mxu0
        %v2521 = vadd.f32 %v2324, %v2520
        %v2522 = vpop.f32.mrb[0].mxu0
        %v2523 = vpop.f32.mrb[0].mxu0
        %v2524 = vadd.f32 %v2324, %v2523
        %v2525 = vpop.f32.mrb[0].mxu0
        %2526 = vmatprep.mubr.bf16.mxu0 0
        %2527 = vmatmul.mubr.bf16.gmra.mrb[0].mxu0 %v2302
        %v2528 = vpop.f32.mrb[0].mxu0
        %v2529 = vadd.f32 %v2324, %v2528
        %v2530 = vpop.f32.mrb[0].mxu0
        %v2531 = vpop.f32.mrb[0].mxu0
        %v2532 = vadd.f32 %v2324, %v2531
        %v2533 = vpop.f32.mrb[0].mxu0
        %2534 = vdwg.mxu0
        %2535 = vst [vmem:[%s271] sm:$0xff] %v2409
        %2536 = vst [vmem:[%s271 + $0x8] sm:$0xff] %v2412
        %2537 = vst [vmem:[%s271 + $0x10] sm:$0xff] %v2417
        %2538 = vst [vmem:[%s271 + $0x18] sm:$0xff] %v2420
        %2539 = vst [vmem:[%s271 + $0x20] sm:$0xff] %v2425
        %2540 = vst [vmem:[%s271 + $0x28] sm:$0xff] %v2428
        %2541 = vst [vmem:[%s271 + $0x30] sm:$0xff] %v2433
        %2542 = vst [vmem:[%s271 + $0x38] sm:$0xff] %v2436
        %2543 = vst [vmem:[%s271 + $0x40] sm:$0xff] %v2441
        %2544 = vst [vmem:[%s271 + $0x48] sm:$0xff] %v2444
        %2545 = vst [vmem:[%s271 + $0x50] sm:$0xff] %v2449
        %2546 = vst [vmem:[%s271 + $0x58] sm:$0xff] %v2452
        %2547 = vst [vmem:[%s271 + $0x60] sm:$0xff] %v2457
        %2548 = vst [vmem:[%s271 + $0x68] sm:$0xff] %v2460
        %2549 = vst [vmem:[%s271 + $0x70] sm:$0xff] %v2465
        %2550 = vst [vmem:[%s271 + $0x78] sm:$0xff] %v2468
        %2551 = vst [vmem:[%s271 + $0x80] sm:$0xff] %v2473
        %2552 = vst [vmem:[%s271 + $0x88] sm:$0xff] %v2476
        %2553 = vst [vmem:[%s271 + $0x90] sm:$0xff] %v2481
        %2554 = vst [vmem:[%s271 + $0x98] sm:$0xff] %v2484
        %2555 = vst [vmem:[%s271 + $0xa0] sm:$0xff] %v2489
        %2556 = vst [vmem:[%s271 + $0xa8] sm:$0xff] %v2492
        %2557 = vst [vmem:[%s271 + $0xb0] sm:$0xff] %v2497
        %2558 = vst [vmem:[%s271 + $0xb8] sm:$0xff] %v2500
        %2559 = vst [vmem:[%s271 + $0xc0] sm:$0xff] %v2505
        %2560 = vst [vmem:[%s271 + $0xc8] sm:$0xff] %v2508
        %2561 = vst [vmem:[%s271 + $0xd0] sm:$0xff] %v2513
        %2562 = vst [vmem:[%s271 + $0xd8] sm:$0xff] %v2516
        %2563 = vst [vmem:[%s271 + $0xe0] sm:$0xff] %v2521
        %2564 = vst [vmem:[%s271 + $0xe8] sm:$0xff] %v2524
        %2565 = vst [vmem:[%s271 + $0xf0] sm:$0xff] %v2529
        %2566 = vst [vmem:[%s271 + $0xf8] sm:$0xff] %v2532
        %s2567 = sand.u32 %s181, 1
        %s2568 = scalar_lea.sflag [#allocation4], %s2567
        %s2569 = sand.u32 %s181, 1
        %s2570 = smul.addr %s2569, 256
        %s2571 = scalar_lea.vmem [#allocation3], %s2570
        // Predicated region
        $region49: #{tpu_custom_call.1} parent=47 // pred_check
          %p2572 = pneg %p191
        $region50: #{tpu_custom_call.1} parent=47 // pred_check_branch
          %2574 = sbr.rel (%p2572) target = $region52
        $region51: #{tpu_custom_call.1} parent=47 // pred_region
          %s2576 = ssub.s32 4096, 4096
          %2577 = vsyncadd %s2568, %s2576
          %s2578 = smul.addr %s21, 32
          %s2579 = smul.addr %s2578, 128
          %s2580 = scalar_lea.hbm %s7, %s2579
          %s2581 = sshll.u32 %s2571, 4
          %s2582 = int_to_ptr.vmem [resolvable:$true] %s2581
          %2587 = dma.vmem_to_hbm [thread:$0]  %s2582, 4096, %s2580, %s2568, 128, 128, 8
        $region52: #{tpu_custom_call.1} parent=47 // pred_fallthru
          _
      $region48: #{tpu_custom_call.1} parent=5 // pred_fallthru
        _
      %p2588 = scmp.le.s32.totalorder 2, %s16
      // Predicated region
      $region53: #{tpu_custom_call.1} parent=5 // pred_check
        %p2589 = pneg %p2588
      $region54: #{tpu_custom_call.1} parent=5 // pred_check_branch
        %2591 = sbr.rel (%p2589) target = $region56
      $region55: #{tpu_custom_call.1} parent=5 // pred_region
        %s2592 = ssub.s32 %s16, 2
        // Predicated region
        $region57: #{tpu_custom_call.1} parent=55 // pred_check
          %p2593 = pneg %p197
        $region58: #{tpu_custom_call.1} parent=55 // pred_check_branch
          %2595 = sbr.rel (%p2593) target = $region60
        $region59: #{tpu_custom_call.1} parent=55 // pred_region
          %s2596 = sand.u32 %s182, 1
          %s2597 = scalar_lea.sflag [#allocation4], %s2596
          %s2598 = sand.u32 %s182, 1
          %s2599 = smul.addr %s2598, 256
          %s2600 = scalar_lea.vmem [#allocation3], %s2599
          %2601 = dma.done %s2597, 4096
        $region60: #{tpu_custom_call.1} parent=55 // pred_fallthru
          _
      $region56: #{tpu_custom_call.1} parent=5 // pred_fallthru
        _
    $region6: #{tpu_custom_call.1} parent=1 // loop_footer
      %s20 = sadd.s32 1, %s16
    $region7: #{tpu_custom_call.1} parent=1 // loop_footer_branch
      %15 = sbr.rel target = $region3
    $region8: #{tpu_custom_call.1} parent=1 // loop_exit
      _
    %2602 = vsyncpa [#allocation4], 1
    %s2603 = scalar_lea.sflag [#allocation4], 1
    %2604 = vsyncpa %s2603, 1

</llo_original>
